<compile_context>
chip_gen: v7x
topology: tpu7x:2x2x1
jax: 0.10.0
libtpu: 0.0.40
codegen_flags: <defaults>
</compile_context>

<pallas_src>
import math

import jax
import jax.numpy as jnp
from jax import lax
from jax.experimental import pallas as pl
from jax.experimental.pallas import tpu as pltpu


# ---------------------------------------------------------------------------
# Fused Pallas kernel: mean/max over channels -> pad -> 7x7 conv -> sigmoid
# ---------------------------------------------------------------------------
def _spatial_attention_kernel(w_ref, x_ref, o_ref, pad_ref):
    # w_ref  : SMEM (2*k*k,)  conv weights, (c, kh, kw) row-major
    # x_ref  : VMEM (1, C, H, W)  one batch element
    # o_ref  : VMEM (1, 1, H, W)  output block
    # pad_ref: VMEM (2, H+2p, W+2p) scratch: zero-padded [avg, max] maps
    _, _, H, W = o_ref.shape
    Hp = pad_ref.shape[1]
    p = (Hp - H) // 2
    k = 2 * p + 1

    x = x_ref[0].astype(jnp.float32)            # (C, H, W)
    inv_c = 1.0 / x.shape[0]

    # Build the zero-padded (avg, max) channel maps directly in VMEM scratch.
    pad_ref[...] = jnp.zeros_like(pad_ref)
    pad_ref[0, p:p + H, p:p + W] = jnp.sum(x, axis=0) * inv_c
    pad_ref[1, p:p + H, p:p + W] = jnp.max(x, axis=0)

    # k x k conv over the 2-channel (avg, max) map as 2*k*k shifted MACs.
    acc = jnp.zeros((H, W), jnp.float32)
    for c in range(2):
        for kh in range(k):
            for kw in range(k):
                wgt = w_ref[(c * k + kh) * k + kw]          # SMEM scalar read
                acc = acc + wgt * pad_ref[c, kh:kh + H, kw:kw + W]

    o_ref[0, 0] = (1.0 / (1.0 + jnp.exp(-acc))).astype(o_ref.dtype)


def spatial_attention_forward(x, weight, kernel_size=7):
    """SpatialAttention forward.

    x:      (N, C, H, W) float input (NCHW, same as PyTorch).
    weight: (1, 2, k, k) PyTorch Conv2d weight (out=1, in=2, no bias).
    returns (N, 1, H, W) sigmoid attention map.
    """
    assert kernel_size in (3, 7), "kernel size must be 3 or 7"
    N, C, H, W = x.shape
    p = kernel_size // 2
    w_flat = weight.reshape(-1).astype(jnp.float32)         # (2*k*k,), one-time prep

    return pl.pallas_call(
        _spatial_attention_kernel,
        grid=(N,),
        in_specs=[
            pl.BlockSpec(memory_space=pltpu.MemorySpace.SMEM),      # conv weights
            pl.BlockSpec((1, C, H, W), lambda n: (n, 0, 0, 0)),     # x (per batch)
        ],
        out_specs=pl.BlockSpec((1, 1, H, W), lambda n: (n, 0, 0, 0)),
        out_shape=jax.ShapeDtypeStruct((N, 1, H, W), x.dtype),
        scratch_shapes=[pltpu.VMEM((2, H + 2 * p, W + 2 * p), jnp.float32)],
        compiler_params=pltpu.CompilerParams(dimension_semantics=("parallel",)),
    )(w_flat, x)


# ---------------------------------------------------------------------------
# Pure-JAX reference (lax conv) for correctness check
# ---------------------------------------------------------------------------
def reference_forward(x, weight):
    avg = jnp.mean(x, axis=1, keepdims=True)
    mx = jnp.max(x, axis=1, keepdims=True)
    xin = jnp.concatenate([avg, mx], axis=1)                # (N, 2, H, W)
    p = weight.shape[-1] // 2
    y = lax.conv_general_dilated(
        xin, weight, window_strides=(1, 1), padding=((p, p), (p, p)),
        dimension_numbers=("NCHW", "OIHW", "NCHW"))
    return jax.nn.sigmoid(y)


if __name__ == "__main__":
    key = jax.random.PRNGKey(0)
    kx, kw = jax.random.split(key)

    N, C, H, W = 2, 4, 16, 16
    ksize = 7
    x = jax.random.normal(kx, (N, C, H, W), jnp.float32)
    # PyTorch Conv2d default init: U(-1/sqrt(fan_in), 1/sqrt(fan_in)), fan_in = 2*k*k
    bound = 1.0 / math.sqrt(2 * ksize * ksize)
    weight = jax.random.uniform(kw, (1, 2, ksize, ksize), jnp.float32, -bound, bound)

    out = spatial_attention_forward(x, weight, kernel_size=ksize)
    out = jax.block_until_ready(out)
    assert out.shape == (N, 1, H, W), out.shape

    ref = reference_forward(x, weight)
    if not jnp.allclose(out, ref, atol=1e-5, rtol=1e-5):
        raise AssertionError("Pallas output does not match JAX reference")
    print("KERNEL_OK")
</pallas_src>

<mosaic_0001>
module attributes {stable_mosaic.version = 11 : i64} {
  func.func @_spatial_attention_kernel(%arg0: i32, %arg1: memref<98xf32, #tpu.memory_space<smem>>, %arg2: memref<1x4x16x16xf32, #tpu.memory_space<vmem>>, %arg3: memref<1x1x16x16xf32, #tpu.memory_space<vmem>>, %arg4: memref<2x22x22xf32, #tpu.memory_space<vmem>>) attributes {dimension_semantics = [#tpu.dimension_semantics<parallel>], iteration_bounds = array<i64: 2>, scalar_prefetch = 0 : i64, scratch_operands = 1 : i64, tpu.core_type = #tpu.core_type<tc>, window_params = [{transform_indices = @transform_0, window_bounds = array<i64: 98>}, {transform_indices = @transform_1, window_bounds = array<i64: 1, 4, 16, 16>}, {transform_indices = @transform_2, window_bounds = array<i64: 1, 1, 16, 16>}]} {
    %c0 = arith.constant 0 : index
    %c0_0 = arith.constant 0 : index
    %c0_1 = arith.constant 0 : index
    %c0_2 = arith.constant 0 : index
    %0 = vector.load %arg2[%c0, %c0_0, %c0_1, %c0_2] : memref<1x4x16x16xf32, #tpu.memory_space<vmem>>, vector<1x4x16x16xf32>
    %1 = vector.shape_cast %0 : vector<1x4x16x16xf32> to vector<4x16x16xf32>
    %cst = arith.constant 0.000000e+00 : f32
    %2 = vector.broadcast %cst : f32 to vector<2x22x22xf32>
    %c0_3 = arith.constant 0 : index
    %c0_4 = arith.constant 0 : index
    %c0_5 = arith.constant 0 : index
    %3 = vector.load %arg4[%c0_3, %c0_4, %c0_5] : memref<2x22x22xf32, #tpu.memory_space<vmem>>, vector<2x22x22xf32>
    tpu.vector_store %arg4[%c0_3, %c0_4, %c0_5], %2 {strides = array<i32>} : memref<2x22x22xf32, #tpu.memory_space<vmem>>, vector<2x22x22xf32>,
    %cst_6 = arith.constant dense<0.000000e+00> : vector<16x16xf32>
    %4 = vector.multi_reduction <add>, %1, %cst_6 [0] : vector<4x16x16xf32> to vector<16x16xf32>
    %cst_7 = arith.constant 2.500000e-01 : f32
    %5 = vector.broadcast %cst_7 : f32 to vector<16x16xf32>
    %6 = arith.mulf %4, %5 : vector<16x16xf32>
    %c0_8 = arith.constant 0 : index
    %c3 = arith.constant 3 : index
    %c3_9 = arith.constant 3 : index
    %7 = vector.load %arg4[%c0_8, %c3, %c3_9] : memref<2x22x22xf32, #tpu.memory_space<vmem>>, vector<1x16x16xf32>
    %8 = vector.shape_cast %7 : vector<1x16x16xf32> to vector<16x16xf32>
    %9 = vector.shape_cast %6 : vector<16x16xf32> to vector<1x16x16xf32>
    tpu.vector_store %arg4[%c0_8, %c3, %c3_9], %9 {strides = array<i32>} : memref<2x22x22xf32, #tpu.memory_space<vmem>>, vector<1x16x16xf32>,
    %cst_10 = arith.constant dense<0xFF800000> : vector<16x16xf32>
    %10 = vector.multi_reduction <maximumf>, %1, %cst_10 [0] : vector<4x16x16xf32> to vector<16x16xf32>
    %c1 = arith.constant 1 : index
    %c3_11 = arith.constant 3 : index
    %c3_12 = arith.constant 3 : index
    %11 = vector.load %arg4[%c1, %c3_11, %c3_12] : memref<2x22x22xf32, #tpu.memory_space<vmem>>, vector<1x16x16xf32>
    %12 = vector.shape_cast %11 : vector<1x16x16xf32> to vector<16x16xf32>
    %13 = vector.shape_cast %10 : vector<16x16xf32> to vector<1x16x16xf32>
    tpu.vector_store %arg4[%c1, %c3_11, %c3_12], %13 {strides = array<i32>} : memref<2x22x22xf32, #tpu.memory_space<vmem>>, vector<1x16x16xf32>,
    %cst_13 = arith.constant 0.000000e+00 : f32
    %14 = vector.broadcast %cst_13 : f32 to vector<16x16xf32>
    %c0_14 = arith.constant 0 : index
    %15 = memref.load %arg1[%c0_14] : memref<98xf32, #tpu.memory_space<smem>>
    %c0_15 = arith.constant 0 : index
    %c0_16 = arith.constant 0 : index
    %c0_17 = arith.constant 0 : index
    %16 = vector.load %arg4[%c0_15, %c0_16, %c0_17] : memref<2x22x22xf32, #tpu.memory_space<vmem>>, vector<1x16x16xf32>
    %17 = vector.shape_cast %16 : vector<1x16x16xf32> to vector<16x16xf32>
    %18 = vector.broadcast %15 : f32 to vector<16x16xf32>
    %19 = arith.mulf %18, %17 : vector<16x16xf32>
    %20 = arith.addf %14, %19 : vector<16x16xf32>
    %c1_18 = arith.constant 1 : index
    %21 = memref.load %arg1[%c1_18] : memref<98xf32, #tpu.memory_space<smem>>
    %c0_19 = arith.constant 0 : index
    %c0_20 = arith.constant 0 : index
    %c1_21 = arith.constant 1 : index
    %22 = vector.load %arg4[%c0_19, %c0_20, %c1_21] : memref<2x22x22xf32, #tpu.memory_space<vmem>>, vector<1x16x16xf32>
    %23 = vector.shape_cast %22 : vector<1x16x16xf32> to vector<16x16xf32>
    %24 = vector.broadcast %21 : f32 to vector<16x16xf32>
    %25 = arith.mulf %24, %23 : vector<16x16xf32>
    %26 = arith.addf %20, %25 : vector<16x16xf32>
    %c2 = arith.constant 2 : index
    %27 = memref.load %arg1[%c2] : memref<98xf32, #tpu.memory_space<smem>>
    %c0_22 = arith.constant 0 : index
    %c0_23 = arith.constant 0 : index
    %c2_24 = arith.constant 2 : index
    %28 = vector.load %arg4[%c0_22, %c0_23, %c2_24] : memref<2x22x22xf32, #tpu.memory_space<vmem>>, vector<1x16x16xf32>
    %29 = vector.shape_cast %28 : vector<1x16x16xf32> to vector<16x16xf32>
    %30 = vector.broadcast %27 : f32 to vector<16x16xf32>
    %31 = arith.mulf %30, %29 : vector<16x16xf32>
    %32 = arith.addf %26, %31 : vector<16x16xf32>
    %c3_25 = arith.constant 3 : index
    %33 = memref.load %arg1[%c3_25] : memref<98xf32, #tpu.memory_space<smem>>
    %c0_26 = arith.constant 0 : index
    %c0_27 = arith.constant 0 : index
    %c3_28 = arith.constant 3 : index
    %34 = vector.load %arg4[%c0_26, %c0_27, %c3_28] : memref<2x22x22xf32, #tpu.memory_space<vmem>>, vector<1x16x16xf32>
    %35 = vector.shape_cast %34 : vector<1x16x16xf32> to vector<16x16xf32>
    %36 = vector.broadcast %33 : f32 to vector<16x16xf32>
    %37 = arith.mulf %36, %35 : vector<16x16xf32>
    %38 = arith.addf %32, %37 : vector<16x16xf32>
    %c4 = arith.constant 4 : index
    %39 = memref.load %arg1[%c4] : memref<98xf32, #tpu.memory_space<smem>>
    %c0_29 = arith.constant 0 : index
    %c0_30 = arith.constant 0 : index
    %c4_31 = arith.constant 4 : index
    %40 = vector.load %arg4[%c0_29, %c0_30, %c4_31] : memref<2x22x22xf32, #tpu.memory_space<vmem>>, vector<1x16x16xf32>
    %41 = vector.shape_cast %40 : vector<1x16x16xf32> to vector<16x16xf32>
    %42 = vector.broadcast %39 : f32 to vector<16x16xf32>
    %43 = arith.mulf %42, %41 : vector<16x16xf32>
    %44 = arith.addf %38, %43 : vector<16x16xf32>
    %c5 = arith.constant 5 : index
    %45 = memref.load %arg1[%c5] : memref<98xf32, #tpu.memory_space<smem>>
    %c0_32 = arith.constant 0 : index
    %c0_33 = arith.constant 0 : index
    %c5_34 = arith.constant 5 : index
    %46 = vector.load %arg4[%c0_32, %c0_33, %c5_34] : memref<2x22x22xf32, #tpu.memory_space<vmem>>, vector<1x16x16xf32>
    %47 = vector.shape_cast %46 : vector<1x16x16xf32> to vector<16x16xf32>
    %48 = vector.broadcast %45 : f32 to vector<16x16xf32>
    %49 = arith.mulf %48, %47 : vector<16x16xf32>
    %50 = arith.addf %44, %49 : vector<16x16xf32>
    %c6 = arith.constant 6 : index
    %51 = memref.load %arg1[%c6] : memref<98xf32, #tpu.memory_space<smem>>
    %c0_35 = arith.constant 0 : index
    %c0_36 = arith.constant 0 : index
    %c6_37 = arith.constant 6 : index
    %52 = vector.load %arg4[%c0_35, %c0_36, %c6_37] : memref<2x22x22xf32, #tpu.memory_space<vmem>>, vector<1x16x16xf32>
    %53 = vector.shape_cast %52 : vector<1x16x16xf32> to vector<16x16xf32>
    %54 = vector.broadcast %51 : f32 to vector<16x16xf32>
    %55 = arith.mulf %54, %53 : vector<16x16xf32>
    %56 = arith.addf %50, %55 : vector<16x16xf32>
    %c7 = arith.constant 7 : index
    %57 = memref.load %arg1[%c7] : memref<98xf32, #tpu.memory_space<smem>>
    %c0_38 = arith.constant 0 : index
    %c1_39 = arith.constant 1 : index
    %c0_40 = arith.constant 0 : index
    %58 = vector.load %arg4[%c0_38, %c1_39, %c0_40] : memref<2x22x22xf32, #tpu.memory_space<vmem>>, vector<1x16x16xf32>
    %59 = vector.shape_cast %58 : vector<1x16x16xf32> to vector<16x16xf32>
    %60 = vector.broadcast %57 : f32 to vector<16x16xf32>
    %61 = arith.mulf %60, %59 : vector<16x16xf32>
    %62 = arith.addf %56, %61 : vector<16x16xf32>
    %c8 = arith.constant 8 : index
    %63 = memref.load %arg1[%c8] : memref<98xf32, #tpu.memory_space<smem>>
    %c0_41 = arith.constant 0 : index
    %c1_42 = arith.constant 1 : index
    %c1_43 = arith.constant 1 : index
    %64 = vector.load %arg4[%c0_41, %c1_42, %c1_43] : memref<2x22x22xf32, #tpu.memory_space<vmem>>, vector<1x16x16xf32>
    %65 = vector.shape_cast %64 : vector<1x16x16xf32> to vector<16x16xf32>
    %66 = vector.broadcast %63 : f32 to vector<16x16xf32>
    %67 = arith.mulf %66, %65 : vector<16x16xf32>
    %68 = arith.addf %62, %67 : vector<16x16xf32>
    %c9 = arith.constant 9 : index
    %69 = memref.load %arg1[%c9] : memref<98xf32, #tpu.memory_space<smem>>
    %c0_44 = arith.constant 0 : index
    %c1_45 = arith.constant 1 : index
    %c2_46 = arith.constant 2 : index
    %70 = vector.load %arg4[%c0_44, %c1_45, %c2_46] : memref<2x22x22xf32, #tpu.memory_space<vmem>>, vector<1x16x16xf32>
    %71 = vector.shape_cast %70 : vector<1x16x16xf32> to vector<16x16xf32>
    %72 = vector.broadcast %69 : f32 to vector<16x16xf32>
    %73 = arith.mulf %72, %71 : vector<16x16xf32>
    %74 = arith.addf %68, %73 : vector<16x16xf32>
    %c10 = arith.constant 10 : index
    %75 = memref.load %arg1[%c10] : memref<98xf32, #tpu.memory_space<smem>>
    %c0_47 = arith.constant 0 : index
    %c1_48 = arith.constant 1 : index
    %c3_49 = arith.constant 3 : index
    %76 = vector.load %arg4[%c0_47, %c1_48, %c3_49] : memref<2x22x22xf32, #tpu.memory_space<vmem>>, vector<1x16x16xf32>
    %77 = vector.shape_cast %76 : vector<1x16x16xf32> to vector<16x16xf32>
    %78 = vector.broadcast %75 : f32 to vector<16x16xf32>
    %79 = arith.mulf %78, %77 : vector<16x16xf32>
    %80 = arith.addf %74, %79 : vector<16x16xf32>
    %c11 = arith.constant 11 : index
    %81 = memref.load %arg1[%c11] : memref<98xf32, #tpu.memory_space<smem>>
    %c0_50 = arith.constant 0 : index
    %c1_51 = arith.constant 1 : index
    %c4_52 = arith.constant 4 : index
    %82 = vector.load %arg4[%c0_50, %c1_51, %c4_52] : memref<2x22x22xf32, #tpu.memory_space<vmem>>, vector<1x16x16xf32>
    %83 = vector.shape_cast %82 : vector<1x16x16xf32> to vector<16x16xf32>
    %84 = vector.broadcast %81 : f32 to vector<16x16xf32>
    %85 = arith.mulf %84, %83 : vector<16x16xf32>
    %86 = arith.addf %80, %85 : vector<16x16xf32>
    %c12 = arith.constant 12 : index
    %87 = memref.load %arg1[%c12] : memref<98xf32, #tpu.memory_space<smem>>
    %c0_53 = arith.constant 0 : index
    %c1_54 = arith.constant 1 : index
    %c5_55 = arith.constant 5 : index
    %88 = vector.load %arg4[%c0_53, %c1_54, %c5_55] : memref<2x22x22xf32, #tpu.memory_space<vmem>>, vector<1x16x16xf32>
    %89 = vector.shape_cast %88 : vector<1x16x16xf32> to vector<16x16xf32>
    %90 = vector.broadcast %87 : f32 to vector<16x16xf32>
    %91 = arith.mulf %90, %89 : vector<16x16xf32>
    %92 = arith.addf %86, %91 : vector<16x16xf32>
    %c13 = arith.constant 13 : index
    %93 = memref.load %arg1[%c13] : memref<98xf32, #tpu.memory_space<smem>>
    %c0_56 = arith.constant 0 : index
    %c1_57 = arith.constant 1 : index
    %c6_58 = arith.constant 6 : index
    %94 = vector.load %arg4[%c0_56, %c1_57, %c6_58] : memref<2x22x22xf32, #tpu.memory_space<vmem>>, vector<1x16x16xf32>
    %95 = vector.shape_cast %94 : vector<1x16x16xf32> to vector<16x16xf32>
    %96 = vector.broadcast %93 : f32 to vector<16x16xf32>
    %97 = arith.mulf %96, %95 : vector<16x16xf32>
    %98 = arith.addf %92, %97 : vector<16x16xf32>
    %c14 = arith.constant 14 : index
    %99 = memref.load %arg1[%c14] : memref<98xf32, #tpu.memory_space<smem>>
    %c0_59 = arith.constant 0 : index
    %c2_60 = arith.constant 2 : index
    %c0_61 = arith.constant 0 : index
    %100 = vector.load %arg4[%c0_59, %c2_60, %c0_61] : memref<2x22x22xf32, #tpu.memory_space<vmem>>, vector<1x16x16xf32>
    %101 = vector.shape_cast %100 : vector<1x16x16xf32> to vector<16x16xf32>
    %102 = vector.broadcast %99 : f32 to vector<16x16xf32>
    %103 = arith.mulf %102, %101 : vector<16x16xf32>
    %104 = arith.addf %98, %103 : vector<16x16xf32>
    %c15 = arith.constant 15 : index
    %105 = memref.load %arg1[%c15] : memref<98xf32, #tpu.memory_space<smem>>
    %c0_62 = arith.constant 0 : index
    %c2_63 = arith.constant 2 : index
    %c1_64 = arith.constant 1 : index
    %106 = vector.load %arg4[%c0_62, %c2_63, %c1_64] : memref<2x22x22xf32, #tpu.memory_space<vmem>>, vector<1x16x16xf32>
    %107 = vector.shape_cast %106 : vector<1x16x16xf32> to vector<16x16xf32>
    %108 = vector.broadcast %105 : f32 to vector<16x16xf32>
    %109 = arith.mulf %108, %107 : vector<16x16xf32>
    %110 = arith.addf %104, %109 : vector<16x16xf32>
    %c16 = arith.constant 16 : index
    %111 = memref.load %arg1[%c16] : memref<98xf32, #tpu.memory_space<smem>>
    %c0_65 = arith.constant 0 : index
    %c2_66 = arith.constant 2 : index
    %c2_67 = arith.constant 2 : index
    %112 = vector.load %arg4[%c0_65, %c2_66, %c2_67] : memref<2x22x22xf32, #tpu.memory_space<vmem>>, vector<1x16x16xf32>
    %113 = vector.shape_cast %112 : vector<1x16x16xf32> to vector<16x16xf32>
    %114 = vector.broadcast %111 : f32 to vector<16x16xf32>
    %115 = arith.mulf %114, %113 : vector<16x16xf32>
    %116 = arith.addf %110, %115 : vector<16x16xf32>
    %c17 = arith.constant 17 : index
    %117 = memref.load %arg1[%c17] : memref<98xf32, #tpu.memory_space<smem>>
    %c0_68 = arith.constant 0 : index
    %c2_69 = arith.constant 2 : index
    %c3_70 = arith.constant 3 : index
    %118 = vector.load %arg4[%c0_68, %c2_69, %c3_70] : memref<2x22x22xf32, #tpu.memory_space<vmem>>, vector<1x16x16xf32>
    %119 = vector.shape_cast %118 : vector<1x16x16xf32> to vector<16x16xf32>
    %120 = vector.broadcast %117 : f32 to vector<16x16xf32>
    %121 = arith.mulf %120, %119 : vector<16x16xf32>
    %122 = arith.addf %116, %121 : vector<16x16xf32>
    %c18 = arith.constant 18 : index
    %123 = memref.load %arg1[%c18] : memref<98xf32, #tpu.memory_space<smem>>
    %c0_71 = arith.constant 0 : index
    %c2_72 = arith.constant 2 : index
    %c4_73 = arith.constant 4 : index
    %124 = vector.load %arg4[%c0_71, %c2_72, %c4_73] : memref<2x22x22xf32, #tpu.memory_space<vmem>>, vector<1x16x16xf32>
    %125 = vector.shape_cast %124 : vector<1x16x16xf32> to vector<16x16xf32>
    %126 = vector.broadcast %123 : f32 to vector<16x16xf32>
    %127 = arith.mulf %126, %125 : vector<16x16xf32>
    %128 = arith.addf %122, %127 : vector<16x16xf32>
    %c19 = arith.constant 19 : index
    %129 = memref.load %arg1[%c19] : memref<98xf32, #tpu.memory_space<smem>>
    %c0_74 = arith.constant 0 : index
    %c2_75 = arith.constant 2 : index
    %c5_76 = arith.constant 5 : index
    %130 = vector.load %arg4[%c0_74, %c2_75, %c5_76] : memref<2x22x22xf32, #tpu.memory_space<vmem>>, vector<1x16x16xf32>
    %131 = vector.shape_cast %130 : vector<1x16x16xf32> to vector<16x16xf32>
    %132 = vector.broadcast %129 : f32 to vector<16x16xf32>
    %133 = arith.mulf %132, %131 : vector<16x16xf32>
    %134 = arith.addf %128, %133 : vector<16x16xf32>
    %c20 = arith.constant 20 : index
    %135 = memref.load %arg1[%c20] : memref<98xf32, #tpu.memory_space<smem>>
    %c0_77 = arith.constant 0 : index
    %c2_78 = arith.constant 2 : index
    %c6_79 = arith.constant 6 : index
    %136 = vector.load %arg4[%c0_77, %c2_78, %c6_79] : memref<2x22x22xf32, #tpu.memory_space<vmem>>, vector<1x16x16xf32>
    %137 = vector.shape_cast %136 : vector<1x16x16xf32> to vector<16x16xf32>
    %138 = vector.broadcast %135 : f32 to vector<16x16xf32>
    %139 = arith.mulf %138, %137 : vector<16x16xf32>
    %140 = arith.addf %134, %139 : vector<16x16xf32>
    %c21 = arith.constant 21 : index
    %141 = memref.load %arg1[%c21] : memref<98xf32, #tpu.memory_space<smem>>
    %c0_80 = arith.constant 0 : index
    %c3_81 = arith.constant 3 : index
    %c0_82 = arith.constant 0 : index
    %142 = vector.load %arg4[%c0_80, %c3_81, %c0_82] : memref<2x22x22xf32, #tpu.memory_space<vmem>>, vector<1x16x16xf32>
    %143 = vector.shape_cast %142 : vector<1x16x16xf32> to vector<16x16xf32>
    %144 = vector.broadcast %141 : f32 to vector<16x16xf32>
    %145 = arith.mulf %144, %143 : vector<16x16xf32>
    %146 = arith.addf %140, %145 : vector<16x16xf32>
    %c22 = arith.constant 22 : index
    %147 = memref.load %arg1[%c22] : memref<98xf32, #tpu.memory_space<smem>>
    %c0_83 = arith.constant 0 : index
    %c3_84 = arith.constant 3 : index
    %c1_85 = arith.constant 1 : index
    %148 = vector.load %arg4[%c0_83, %c3_84, %c1_85] : memref<2x22x22xf32, #tpu.memory_space<vmem>>, vector<1x16x16xf32>
    %149 = vector.shape_cast %148 : vector<1x16x16xf32> to vector<16x16xf32>
    %150 = vector.broadcast %147 : f32 to vector<16x16xf32>
    %151 = arith.mulf %150, %149 : vector<16x16xf32>
    %152 = arith.addf %146, %151 : vector<16x16xf32>
    %c23 = arith.constant 23 : index
    %153 = memref.load %arg1[%c23] : memref<98xf32, #tpu.memory_space<smem>>
    %c0_86 = arith.constant 0 : index
    %c3_87 = arith.constant 3 : index
    %c2_88 = arith.constant 2 : index
    %154 = vector.load %arg4[%c0_86, %c3_87, %c2_88] : memref<2x22x22xf32, #tpu.memory_space<vmem>>, vector<1x16x16xf32>
    %155 = vector.shape_cast %154 : vector<1x16x16xf32> to vector<16x16xf32>
    %156 = vector.broadcast %153 : f32 to vector<16x16xf32>
    %157 = arith.mulf %156, %155 : vector<16x16xf32>
    %158 = arith.addf %152, %157 : vector<16x16xf32>
    %c24 = arith.constant 24 : index
    %159 = memref.load %arg1[%c24] : memref<98xf32, #tpu.memory_space<smem>>
    %c0_89 = arith.constant 0 : index
    %c3_90 = arith.constant 3 : index
    %c3_91 = arith.constant 3 : index
    %160 = vector.load %arg4[%c0_89, %c3_90, %c3_91] : memref<2x22x22xf32, #tpu.memory_space<vmem>>, vector<1x16x16xf32>
    %161 = vector.shape_cast %160 : vector<1x16x16xf32> to vector<16x16xf32>
    %162 = vector.broadcast %159 : f32 to vector<16x16xf32>
    %163 = arith.mulf %162, %161 : vector<16x16xf32>
    %164 = arith.addf %158, %163 : vector<16x16xf32>
    %c25 = arith.constant 25 : index
    %165 = memref.load %arg1[%c25] : memref<98xf32, #tpu.memory_space<smem>>
    %c0_92 = arith.constant 0 : index
    %c3_93 = arith.constant 3 : index
    %c4_94 = arith.constant 4 : index
    %166 = vector.load %arg4[%c0_92, %c3_93, %c4_94] : memref<2x22x22xf32, #tpu.memory_space<vmem>>, vector<1x16x16xf32>
    %167 = vector.shape_cast %166 : vector<1x16x16xf32> to vector<16x16xf32>
    %168 = vector.broadcast %165 : f32 to vector<16x16xf32>
    %169 = arith.mulf %168, %167 : vector<16x16xf32>
    %170 = arith.addf %164, %169 : vector<16x16xf32>
    %c26 = arith.constant 26 : index
    %171 = memref.load %arg1[%c26] : memref<98xf32, #tpu.memory_space<smem>>
    %c0_95 = arith.constant 0 : index
    %c3_96 = arith.constant 3 : index
    %c5_97 = arith.constant 5 : index
    %172 = vector.load %arg4[%c0_95, %c3_96, %c5_97] : memref<2x22x22xf32, #tpu.memory_space<vmem>>, vector<1x16x16xf32>
    %173 = vector.shape_cast %172 : vector<1x16x16xf32> to vector<16x16xf32>
    %174 = vector.broadcast %171 : f32 to vector<16x16xf32>
    %175 = arith.mulf %174, %173 : vector<16x16xf32>
    %176 = arith.addf %170, %175 : vector<16x16xf32>
    %c27 = arith.constant 27 : index
    %177 = memref.load %arg1[%c27] : memref<98xf32, #tpu.memory_space<smem>>
    %c0_98 = arith.constant 0 : index
    %c3_99 = arith.constant 3 : index
    %c6_100 = arith.constant 6 : index
    %178 = vector.load %arg4[%c0_98, %c3_99, %c6_100] : memref<2x22x22xf32, #tpu.memory_space<vmem>>, vector<1x16x16xf32>
    %179 = vector.shape_cast %178 : vector<1x16x16xf32> to vector<16x16xf32>
    %180 = vector.broadcast %177 : f32 to vector<16x16xf32>
    %181 = arith.mulf %180, %179 : vector<16x16xf32>
    %182 = arith.addf %176, %181 : vector<16x16xf32>
    %c28 = arith.constant 28 : index
    %183 = memref.load %arg1[%c28] : memref<98xf32, #tpu.memory_space<smem>>
    %c0_101 = arith.constant 0 : index
    %c4_102 = arith.constant 4 : index
    %c0_103 = arith.constant 0 : index
    %184 = vector.load %arg4[%c0_101, %c4_102, %c0_103] : memref<2x22x22xf32, #tpu.memory_space<vmem>>, vector<1x16x16xf32>
    %185 = vector.shape_cast %184 : vector<1x16x16xf32> to vector<16x16xf32>
    %186 = vector.broadcast %183 : f32 to vector<16x16xf32>
    %187 = arith.mulf %186, %185 : vector<16x16xf32>
    %188 = arith.addf %182, %187 : vector<16x16xf32>
    %c29 = arith.constant 29 : index
    %189 = memref.load %arg1[%c29] : memref<98xf32, #tpu.memory_space<smem>>
    %c0_104 = arith.constant 0 : index
    %c4_105 = arith.constant 4 : index
    %c1_106 = arith.constant 1 : index
    %190 = vector.load %arg4[%c0_104, %c4_105, %c1_106] : memref<2x22x22xf32, #tpu.memory_space<vmem>>, vector<1x16x16xf32>
    %191 = vector.shape_cast %190 : vector<1x16x16xf32> to vector<16x16xf32>
    %192 = vector.broadcast %189 : f32 to vector<16x16xf32>
    %193 = arith.mulf %192, %191 : vector<16x16xf32>
    %194 = arith.addf %188, %193 : vector<16x16xf32>
    %c30 = arith.constant 30 : index
    %195 = memref.load %arg1[%c30] : memref<98xf32, #tpu.memory_space<smem>>
    %c0_107 = arith.constant 0 : index
    %c4_108 = arith.constant 4 : index
    %c2_109 = arith.constant 2 : index
    %196 = vector.load %arg4[%c0_107, %c4_108, %c2_109] : memref<2x22x22xf32, #tpu.memory_space<vmem>>, vector<1x16x16xf32>
    %197 = vector.shape_cast %196 : vector<1x16x16xf32> to vector<16x16xf32>
    %198 = vector.broadcast %195 : f32 to vector<16x16xf32>
    %199 = arith.mulf %198, %197 : vector<16x16xf32>
    %200 = arith.addf %194, %199 : vector<16x16xf32>
    %c31 = arith.constant 31 : index
    %201 = memref.load %arg1[%c31] : memref<98xf32, #tpu.memory_space<smem>>
    %c0_110 = arith.constant 0 : index
    %c4_111 = arith.constant 4 : index
    %c3_112 = arith.constant 3 : index
    %202 = vector.load %arg4[%c0_110, %c4_111, %c3_112] : memref<2x22x22xf32, #tpu.memory_space<vmem>>, vector<1x16x16xf32>
    %203 = vector.shape_cast %202 : vector<1x16x16xf32> to vector<16x16xf32>
    %204 = vector.broadcast %201 : f32 to vector<16x16xf32>
    %205 = arith.mulf %204, %203 : vector<16x16xf32>
    %206 = arith.addf %200, %205 : vector<16x16xf32>
    %c32 = arith.constant 32 : index
    %207 = memref.load %arg1[%c32] : memref<98xf32, #tpu.memory_space<smem>>
    %c0_113 = arith.constant 0 : index
    %c4_114 = arith.constant 4 : index
    %c4_115 = arith.constant 4 : index
    %208 = vector.load %arg4[%c0_113, %c4_114, %c4_115] : memref<2x22x22xf32, #tpu.memory_space<vmem>>, vector<1x16x16xf32>
    %209 = vector.shape_cast %208 : vector<1x16x16xf32> to vector<16x16xf32>
    %210 = vector.broadcast %207 : f32 to vector<16x16xf32>
    %211 = arith.mulf %210, %209 : vector<16x16xf32>
    %212 = arith.addf %206, %211 : vector<16x16xf32>
    %c33 = arith.constant 33 : index
    %213 = memref.load %arg1[%c33] : memref<98xf32, #tpu.memory_space<smem>>
    %c0_116 = arith.constant 0 : index
    %c4_117 = arith.constant 4 : index
    %c5_118 = arith.constant 5 : index
    %214 = vector.load %arg4[%c0_116, %c4_117, %c5_118] : memref<2x22x22xf32, #tpu.memory_space<vmem>>, vector<1x16x16xf32>
    %215 = vector.shape_cast %214 : vector<1x16x16xf32> to vector<16x16xf32>
    %216 = vector.broadcast %213 : f32 to vector<16x16xf32>
    %217 = arith.mulf %216, %215 : vector<16x16xf32>
    %218 = arith.addf %212, %217 : vector<16x16xf32>
    %c34 = arith.constant 34 : index
    %219 = memref.load %arg1[%c34] : memref<98xf32, #tpu.memory_space<smem>>
    %c0_119 = arith.constant 0 : index
    %c4_120 = arith.constant 4 : index
    %c6_121 = arith.constant 6 : index
    %220 = vector.load %arg4[%c0_119, %c4_120, %c6_121] : memref<2x22x22xf32, #tpu.memory_space<vmem>>, vector<1x16x16xf32>
    %221 = vector.shape_cast %220 : vector<1x16x16xf32> to vector<16x16xf32>
    %222 = vector.broadcast %219 : f32 to vector<16x16xf32>
    %223 = arith.mulf %222, %221 : vector<16x16xf32>
    %224 = arith.addf %218, %223 : vector<16x16xf32>
    %c35 = arith.constant 35 : index
    %225 = memref.load %arg1[%c35] : memref<98xf32, #tpu.memory_space<smem>>
    %c0_122 = arith.constant 0 : index
    %c5_123 = arith.constant 5 : index
    %c0_124 = arith.constant 0 : index
    %226 = vector.load %arg4[%c0_122, %c5_123, %c0_124] : memref<2x22x22xf32, #tpu.memory_space<vmem>>, vector<1x16x16xf32>
    %227 = vector.shape_cast %226 : vector<1x16x16xf32> to vector<16x16xf32>
    %228 = vector.broadcast %225 : f32 to vector<16x16xf32>
    %229 = arith.mulf %228, %227 : vector<16x16xf32>
    %230 = arith.addf %224, %229 : vector<16x16xf32>
    %c36 = arith.constant 36 : index
    %231 = memref.load %arg1[%c36] : memref<98xf32, #tpu.memory_space<smem>>
    %c0_125 = arith.constant 0 : index
    %c5_126 = arith.constant 5 : index
    %c1_127 = arith.constant 1 : index
    %232 = vector.load %arg4[%c0_125, %c5_126, %c1_127] : memref<2x22x22xf32, #tpu.memory_space<vmem>>, vector<1x16x16xf32>
    %233 = vector.shape_cast %232 : vector<1x16x16xf32> to vector<16x16xf32>
    %234 = vector.broadcast %231 : f32 to vector<16x16xf32>
    %235 = arith.mulf %234, %233 : vector<16x16xf32>
    %236 = arith.addf %230, %235 : vector<16x16xf32>
    %c37 = arith.constant 37 : index
    %237 = memref.load %arg1[%c37] : memref<98xf32, #tpu.memory_space<smem>>
    %c0_128 = arith.constant 0 : index
    %c5_129 = arith.constant 5 : index
    %c2_130 = arith.constant 2 : index
    %238 = vector.load %arg4[%c0_128, %c5_129, %c2_130] : memref<2x22x22xf32, #tpu.memory_space<vmem>>, vector<1x16x16xf32>
    %239 = vector.shape_cast %238 : vector<1x16x16xf32> to vector<16x16xf32>
    %240 = vector.broadcast %237 : f32 to vector<16x16xf32>
    %241 = arith.mulf %240, %239 : vector<16x16xf32>
    %242 = arith.addf %236, %241 : vector<16x16xf32>
    %c38 = arith.constant 38 : index
    %243 = memref.load %arg1[%c38] : memref<98xf32, #tpu.memory_space<smem>>
    %c0_131 = arith.constant 0 : index
    %c5_132 = arith.constant 5 : index
    %c3_133 = arith.constant 3 : index
    %244 = vector.load %arg4[%c0_131, %c5_132, %c3_133] : memref<2x22x22xf32, #tpu.memory_space<vmem>>, vector<1x16x16xf32>
    %245 = vector.shape_cast %244 : vector<1x16x16xf32> to vector<16x16xf32>
    %246 = vector.broadcast %243 : f32 to vector<16x16xf32>
    %247 = arith.mulf %246, %245 : vector<16x16xf32>
    %248 = arith.addf %242, %247 : vector<16x16xf32>
    %c39 = arith.constant 39 : index
    %249 = memref.load %arg1[%c39] : memref<98xf32, #tpu.memory_space<smem>>
    %c0_134 = arith.constant 0 : index
    %c5_135 = arith.constant 5 : index
    %c4_136 = arith.constant 4 : index
    %250 = vector.load %arg4[%c0_134, %c5_135, %c4_136] : memref<2x22x22xf32, #tpu.memory_space<vmem>>, vector<1x16x16xf32>
    %251 = vector.shape_cast %250 : vector<1x16x16xf32> to vector<16x16xf32>
    %252 = vector.broadcast %249 : f32 to vector<16x16xf32>
    %253 = arith.mulf %252, %251 : vector<16x16xf32>
    %254 = arith.addf %248, %253 : vector<16x16xf32>
    %c40 = arith.constant 40 : index
    %255 = memref.load %arg1[%c40] : memref<98xf32, #tpu.memory_space<smem>>
    %c0_137 = arith.constant 0 : index
    %c5_138 = arith.constant 5 : index
    %c5_139 = arith.constant 5 : index
    %256 = vector.load %arg4[%c0_137, %c5_138, %c5_139] : memref<2x22x22xf32, #tpu.memory_space<vmem>>, vector<1x16x16xf32>
    %257 = vector.shape_cast %256 : vector<1x16x16xf32> to vector<16x16xf32>
    %258 = vector.broadcast %255 : f32 to vector<16x16xf32>
    %259 = arith.mulf %258, %257 : vector<16x16xf32>
    %260 = arith.addf %254, %259 : vector<16x16xf32>
    %c41 = arith.constant 41 : index
    %261 = memref.load %arg1[%c41] : memref<98xf32, #tpu.memory_space<smem>>
    %c0_140 = arith.constant 0 : index
    %c5_141 = arith.constant 5 : index
    %c6_142 = arith.constant 6 : index
    %262 = vector.load %arg4[%c0_140, %c5_141, %c6_142] : memref<2x22x22xf32, #tpu.memory_space<vmem>>, vector<1x16x16xf32>
    %263 = vector.shape_cast %262 : vector<1x16x16xf32> to vector<16x16xf32>
    %264 = vector.broadcast %261 : f32 to vector<16x16xf32>
    %265 = arith.mulf %264, %263 : vector<16x16xf32>
    %266 = arith.addf %260, %265 : vector<16x16xf32>
    %c42 = arith.constant 42 : index
    %267 = memref.load %arg1[%c42] : memref<98xf32, #tpu.memory_space<smem>>
    %c0_143 = arith.constant 0 : index
    %c6_144 = arith.constant 6 : index
    %c0_145 = arith.constant 0 : index
    %268 = vector.load %arg4[%c0_143, %c6_144, %c0_145] : memref<2x22x22xf32, #tpu.memory_space<vmem>>, vector<1x16x16xf32>
    %269 = vector.shape_cast %268 : vector<1x16x16xf32> to vector<16x16xf32>
    %270 = vector.broadcast %267 : f32 to vector<16x16xf32>
    %271 = arith.mulf %270, %269 : vector<16x16xf32>
    %272 = arith.addf %266, %271 : vector<16x16xf32>
    %c43 = arith.constant 43 : index
    %273 = memref.load %arg1[%c43] : memref<98xf32, #tpu.memory_space<smem>>
    %c0_146 = arith.constant 0 : index
    %c6_147 = arith.constant 6 : index
    %c1_148 = arith.constant 1 : index
    %274 = vector.load %arg4[%c0_146, %c6_147, %c1_148] : memref<2x22x22xf32, #tpu.memory_space<vmem>>, vector<1x16x16xf32>
    %275 = vector.shape_cast %274 : vector<1x16x16xf32> to vector<16x16xf32>
    %276 = vector.broadcast %273 : f32 to vector<16x16xf32>
    %277 = arith.mulf %276, %275 : vector<16x16xf32>
    %278 = arith.addf %272, %277 : vector<16x16xf32>
    %c44 = arith.constant 44 : index
    %279 = memref.load %arg1[%c44] : memref<98xf32, #tpu.memory_space<smem>>
    %c0_149 = arith.constant 0 : index
    %c6_150 = arith.constant 6 : index
    %c2_151 = arith.constant 2 : index
    %280 = vector.load %arg4[%c0_149, %c6_150, %c2_151] : memref<2x22x22xf32, #tpu.memory_space<vmem>>, vector<1x16x16xf32>
    %281 = vector.shape_cast %280 : vector<1x16x16xf32> to vector<16x16xf32>
    %282 = vector.broadcast %279 : f32 to vector<16x16xf32>
    %283 = arith.mulf %282, %281 : vector<16x16xf32>
    %284 = arith.addf %278, %283 : vector<16x16xf32>
    %c45 = arith.constant 45 : index
    %285 = memref.load %arg1[%c45] : memref<98xf32, #tpu.memory_space<smem>>
    %c0_152 = arith.constant 0 : index
    %c6_153 = arith.constant 6 : index
    %c3_154 = arith.constant 3 : index
    %286 = vector.load %arg4[%c0_152, %c6_153, %c3_154] : memref<2x22x22xf32, #tpu.memory_space<vmem>>, vector<1x16x16xf32>
    %287 = vector.shape_cast %286 : vector<1x16x16xf32> to vector<16x16xf32>
    %288 = vector.broadcast %285 : f32 to vector<16x16xf32>
    %289 = arith.mulf %288, %287 : vector<16x16xf32>
    %290 = arith.addf %284, %289 : vector<16x16xf32>
    %c46 = arith.constant 46 : index
    %291 = memref.load %arg1[%c46] : memref<98xf32, #tpu.memory_space<smem>>
    %c0_155 = arith.constant 0 : index
    %c6_156 = arith.constant 6 : index
    %c4_157 = arith.constant 4 : index
    %292 = vector.load %arg4[%c0_155, %c6_156, %c4_157] : memref<2x22x22xf32, #tpu.memory_space<vmem>>, vector<1x16x16xf32>
    %293 = vector.shape_cast %292 : vector<1x16x16xf32> to vector<16x16xf32>
    %294 = vector.broadcast %291 : f32 to vector<16x16xf32>
    %295 = arith.mulf %294, %293 : vector<16x16xf32>
    %296 = arith.addf %290, %295 : vector<16x16xf32>
    %c47 = arith.constant 47 : index
    %297 = memref.load %arg1[%c47] : memref<98xf32, #tpu.memory_space<smem>>
    %c0_158 = arith.constant 0 : index
    %c6_159 = arith.constant 6 : index
    %c5_160 = arith.constant 5 : index
    %298 = vector.load %arg4[%c0_158, %c6_159, %c5_160] : memref<2x22x22xf32, #tpu.memory_space<vmem>>, vector<1x16x16xf32>
    %299 = vector.shape_cast %298 : vector<1x16x16xf32> to vector<16x16xf32>
    %300 = vector.broadcast %297 : f32 to vector<16x16xf32>
    %301 = arith.mulf %300, %299 : vector<16x16xf32>
    %302 = arith.addf %296, %301 : vector<16x16xf32>
    %c48 = arith.constant 48 : index
    %303 = memref.load %arg1[%c48] : memref<98xf32, #tpu.memory_space<smem>>
    %c0_161 = arith.constant 0 : index
    %c6_162 = arith.constant 6 : index
    %c6_163 = arith.constant 6 : index
    %304 = vector.load %arg4[%c0_161, %c6_162, %c6_163] : memref<2x22x22xf32, #tpu.memory_space<vmem>>, vector<1x16x16xf32>
    %305 = vector.shape_cast %304 : vector<1x16x16xf32> to vector<16x16xf32>
    %306 = vector.broadcast %303 : f32 to vector<16x16xf32>
    %307 = arith.mulf %306, %305 : vector<16x16xf32>
    %308 = arith.addf %302, %307 : vector<16x16xf32>
    %c49 = arith.constant 49 : index
    %309 = memref.load %arg1[%c49] : memref<98xf32, #tpu.memory_space<smem>>
    %c1_164 = arith.constant 1 : index
    %c0_165 = arith.constant 0 : index
    %c0_166 = arith.constant 0 : index
    %310 = vector.load %arg4[%c1_164, %c0_165, %c0_166] : memref<2x22x22xf32, #tpu.memory_space<vmem>>, vector<1x16x16xf32>
    %311 = vector.shape_cast %310 : vector<1x16x16xf32> to vector<16x16xf32>
    %312 = vector.broadcast %309 : f32 to vector<16x16xf32>
    %313 = arith.mulf %312, %311 : vector<16x16xf32>
    %314 = arith.addf %308, %313 : vector<16x16xf32>
    %c50 = arith.constant 50 : index
    %315 = memref.load %arg1[%c50] : memref<98xf32, #tpu.memory_space<smem>>
    %c1_167 = arith.constant 1 : index
    %c0_168 = arith.constant 0 : index
    %c1_169 = arith.constant 1 : index
    %316 = vector.load %arg4[%c1_167, %c0_168, %c1_169] : memref<2x22x22xf32, #tpu.memory_space<vmem>>, vector<1x16x16xf32>
    %317 = vector.shape_cast %316 : vector<1x16x16xf32> to vector<16x16xf32>
    %318 = vector.broadcast %315 : f32 to vector<16x16xf32>
    %319 = arith.mulf %318, %317 : vector<16x16xf32>
    %320 = arith.addf %314, %319 : vector<16x16xf32>
    %c51 = arith.constant 51 : index
    %321 = memref.load %arg1[%c51] : memref<98xf32, #tpu.memory_space<smem>>
    %c1_170 = arith.constant 1 : index
    %c0_171 = arith.constant 0 : index
    %c2_172 = arith.constant 2 : index
    %322 = vector.load %arg4[%c1_170, %c0_171, %c2_172] : memref<2x22x22xf32, #tpu.memory_space<vmem>>, vector<1x16x16xf32>
    %323 = vector.shape_cast %322 : vector<1x16x16xf32> to vector<16x16xf32>
    %324 = vector.broadcast %321 : f32 to vector<16x16xf32>
    %325 = arith.mulf %324, %323 : vector<16x16xf32>
    %326 = arith.addf %320, %325 : vector<16x16xf32>
    %c52 = arith.constant 52 : index
    %327 = memref.load %arg1[%c52] : memref<98xf32, #tpu.memory_space<smem>>
    %c1_173 = arith.constant 1 : index
    %c0_174 = arith.constant 0 : index
    %c3_175 = arith.constant 3 : index
    %328 = vector.load %arg4[%c1_173, %c0_174, %c3_175] : memref<2x22x22xf32, #tpu.memory_space<vmem>>, vector<1x16x16xf32>
    %329 = vector.shape_cast %328 : vector<1x16x16xf32> to vector<16x16xf32>
    %330 = vector.broadcast %327 : f32 to vector<16x16xf32>
    %331 = arith.mulf %330, %329 : vector<16x16xf32>
    %332 = arith.addf %326, %331 : vector<16x16xf32>
    %c53 = arith.constant 53 : index
    %333 = memref.load %arg1[%c53] : memref<98xf32, #tpu.memory_space<smem>>
    %c1_176 = arith.constant 1 : index
    %c0_177 = arith.constant 0 : index
    %c4_178 = arith.constant 4 : index
    %334 = vector.load %arg4[%c1_176, %c0_177, %c4_178] : memref<2x22x22xf32, #tpu.memory_space<vmem>>, vector<1x16x16xf32>
    %335 = vector.shape_cast %334 : vector<1x16x16xf32> to vector<16x16xf32>
    %336 = vector.broadcast %333 : f32 to vector<16x16xf32>
    %337 = arith.mulf %336, %335 : vector<16x16xf32>
    %338 = arith.addf %332, %337 : vector<16x16xf32>
    %c54 = arith.constant 54 : index
    %339 = memref.load %arg1[%c54] : memref<98xf32, #tpu.memory_space<smem>>
    %c1_179 = arith.constant 1 : index
    %c0_180 = arith.constant 0 : index
    %c5_181 = arith.constant 5 : index
    %340 = vector.load %arg4[%c1_179, %c0_180, %c5_181] : memref<2x22x22xf32, #tpu.memory_space<vmem>>, vector<1x16x16xf32>
    %341 = vector.shape_cast %340 : vector<1x16x16xf32> to vector<16x16xf32>
    %342 = vector.broadcast %339 : f32 to vector<16x16xf32>
    %343 = arith.mulf %342, %341 : vector<16x16xf32>
    %344 = arith.addf %338, %343 : vector<16x16xf32>
    %c55 = arith.constant 55 : index
    %345 = memref.load %arg1[%c55] : memref<98xf32, #tpu.memory_space<smem>>
    %c1_182 = arith.constant 1 : index
    %c0_183 = arith.constant 0 : index
    %c6_184 = arith.constant 6 : index
    %346 = vector.load %arg4[%c1_182, %c0_183, %c6_184] : memref<2x22x22xf32, #tpu.memory_space<vmem>>, vector<1x16x16xf32>
    %347 = vector.shape_cast %346 : vector<1x16x16xf32> to vector<16x16xf32>
    %348 = vector.broadcast %345 : f32 to vector<16x16xf32>
    %349 = arith.mulf %348, %347 : vector<16x16xf32>
    %350 = arith.addf %344, %349 : vector<16x16xf32>
    %c56 = arith.constant 56 : index
    %351 = memref.load %arg1[%c56] : memref<98xf32, #tpu.memory_space<smem>>
    %c1_185 = arith.constant 1 : index
    %c1_186 = arith.constant 1 : index
    %c0_187 = arith.constant 0 : index
    %352 = vector.load %arg4[%c1_185, %c1_186, %c0_187] : memref<2x22x22xf32, #tpu.memory_space<vmem>>, vector<1x16x16xf32>
    %353 = vector.shape_cast %352 : vector<1x16x16xf32> to vector<16x16xf32>
    %354 = vector.broadcast %351 : f32 to vector<16x16xf32>
    %355 = arith.mulf %354, %353 : vector<16x16xf32>
    %356 = arith.addf %350, %355 : vector<16x16xf32>
    %c57 = arith.constant 57 : index
    %357 = memref.load %arg1[%c57] : memref<98xf32, #tpu.memory_space<smem>>
    %c1_188 = arith.constant 1 : index
    %c1_189 = arith.constant 1 : index
    %c1_190 = arith.constant 1 : index
    %358 = vector.load %arg4[%c1_188, %c1_189, %c1_190] : memref<2x22x22xf32, #tpu.memory_space<vmem>>, vector<1x16x16xf32>
    %359 = vector.shape_cast %358 : vector<1x16x16xf32> to vector<16x16xf32>
    %360 = vector.broadcast %357 : f32 to vector<16x16xf32>
    %361 = arith.mulf %360, %359 : vector<16x16xf32>
    %362 = arith.addf %356, %361 : vector<16x16xf32>
    %c58 = arith.constant 58 : index
    %363 = memref.load %arg1[%c58] : memref<98xf32, #tpu.memory_space<smem>>
    %c1_191 = arith.constant 1 : index
    %c1_192 = arith.constant 1 : index
    %c2_193 = arith.constant 2 : index
    %364 = vector.load %arg4[%c1_191, %c1_192, %c2_193] : memref<2x22x22xf32, #tpu.memory_space<vmem>>, vector<1x16x16xf32>
    %365 = vector.shape_cast %364 : vector<1x16x16xf32> to vector<16x16xf32>
    %366 = vector.broadcast %363 : f32 to vector<16x16xf32>
    %367 = arith.mulf %366, %365 : vector<16x16xf32>
    %368 = arith.addf %362, %367 : vector<16x16xf32>
    %c59 = arith.constant 59 : index
    %369 = memref.load %arg1[%c59] : memref<98xf32, #tpu.memory_space<smem>>
    %c1_194 = arith.constant 1 : index
    %c1_195 = arith.constant 1 : index
    %c3_196 = arith.constant 3 : index
    %370 = vector.load %arg4[%c1_194, %c1_195, %c3_196] : memref<2x22x22xf32, #tpu.memory_space<vmem>>, vector<1x16x16xf32>
    %371 = vector.shape_cast %370 : vector<1x16x16xf32> to vector<16x16xf32>
    %372 = vector.broadcast %369 : f32 to vector<16x16xf32>
    %373 = arith.mulf %372, %371 : vector<16x16xf32>
    %374 = arith.addf %368, %373 : vector<16x16xf32>
    %c60 = arith.constant 60 : index
    %375 = memref.load %arg1[%c60] : memref<98xf32, #tpu.memory_space<smem>>
    %c1_197 = arith.constant 1 : index
    %c1_198 = arith.constant 1 : index
    %c4_199 = arith.constant 4 : index
    %376 = vector.load %arg4[%c1_197, %c1_198, %c4_199] : memref<2x22x22xf32, #tpu.memory_space<vmem>>, vector<1x16x16xf32>
    %377 = vector.shape_cast %376 : vector<1x16x16xf32> to vector<16x16xf32>
    %378 = vector.broadcast %375 : f32 to vector<16x16xf32>
    %379 = arith.mulf %378, %377 : vector<16x16xf32>
    %380 = arith.addf %374, %379 : vector<16x16xf32>
    %c61 = arith.constant 61 : index
    %381 = memref.load %arg1[%c61] : memref<98xf32, #tpu.memory_space<smem>>
    %c1_200 = arith.constant 1 : index
    %c1_201 = arith.constant 1 : index
    %c5_202 = arith.constant 5 : index
    %382 = vector.load %arg4[%c1_200, %c1_201, %c5_202] : memref<2x22x22xf32, #tpu.memory_space<vmem>>, vector<1x16x16xf32>
    %383 = vector.shape_cast %382 : vector<1x16x16xf32> to vector<16x16xf32>
    %384 = vector.broadcast %381 : f32 to vector<16x16xf32>
    %385 = arith.mulf %384, %383 : vector<16x16xf32>
    %386 = arith.addf %380, %385 : vector<16x16xf32>
    %c62 = arith.constant 62 : index
    %387 = memref.load %arg1[%c62] : memref<98xf32, #tpu.memory_space<smem>>
    %c1_203 = arith.constant 1 : index
    %c1_204 = arith.constant 1 : index
    %c6_205 = arith.constant 6 : index
    %388 = vector.load %arg4[%c1_203, %c1_204, %c6_205] : memref<2x22x22xf32, #tpu.memory_space<vmem>>, vector<1x16x16xf32>
    %389 = vector.shape_cast %388 : vector<1x16x16xf32> to vector<16x16xf32>
    %390 = vector.broadcast %387 : f32 to vector<16x16xf32>
    %391 = arith.mulf %390, %389 : vector<16x16xf32>
    %392 = arith.addf %386, %391 : vector<16x16xf32>
    %c63 = arith.constant 63 : index
    %393 = memref.load %arg1[%c63] : memref<98xf32, #tpu.memory_space<smem>>
    %c1_206 = arith.constant 1 : index
    %c2_207 = arith.constant 2 : index
    %c0_208 = arith.constant 0 : index
    %394 = vector.load %arg4[%c1_206, %c2_207, %c0_208] : memref<2x22x22xf32, #tpu.memory_space<vmem>>, vector<1x16x16xf32>
    %395 = vector.shape_cast %394 : vector<1x16x16xf32> to vector<16x16xf32>
    %396 = vector.broadcast %393 : f32 to vector<16x16xf32>
    %397 = arith.mulf %396, %395 : vector<16x16xf32>
    %398 = arith.addf %392, %397 : vector<16x16xf32>
    %c64 = arith.constant 64 : index
    %399 = memref.load %arg1[%c64] : memref<98xf32, #tpu.memory_space<smem>>
    %c1_209 = arith.constant 1 : index
    %c2_210 = arith.constant 2 : index
    %c1_211 = arith.constant 1 : index
    %400 = vector.load %arg4[%c1_209, %c2_210, %c1_211] : memref<2x22x22xf32, #tpu.memory_space<vmem>>, vector<1x16x16xf32>
    %401 = vector.shape_cast %400 : vector<1x16x16xf32> to vector<16x16xf32>
    %402 = vector.broadcast %399 : f32 to vector<16x16xf32>
    %403 = arith.mulf %402, %401 : vector<16x16xf32>
    %404 = arith.addf %398, %403 : vector<16x16xf32>
    %c65 = arith.constant 65 : index
    %405 = memref.load %arg1[%c65] : memref<98xf32, #tpu.memory_space<smem>>
    %c1_212 = arith.constant 1 : index
    %c2_213 = arith.constant 2 : index
    %c2_214 = arith.constant 2 : index
    %406 = vector.load %arg4[%c1_212, %c2_213, %c2_214] : memref<2x22x22xf32, #tpu.memory_space<vmem>>, vector<1x16x16xf32>
    %407 = vector.shape_cast %406 : vector<1x16x16xf32> to vector<16x16xf32>
    %408 = vector.broadcast %405 : f32 to vector<16x16xf32>
    %409 = arith.mulf %408, %407 : vector<16x16xf32>
    %410 = arith.addf %404, %409 : vector<16x16xf32>
    %c66 = arith.constant 66 : index
    %411 = memref.load %arg1[%c66] : memref<98xf32, #tpu.memory_space<smem>>
    %c1_215 = arith.constant 1 : index
    %c2_216 = arith.constant 2 : index
    %c3_217 = arith.constant 3 : index
    %412 = vector.load %arg4[%c1_215, %c2_216, %c3_217] : memref<2x22x22xf32, #tpu.memory_space<vmem>>, vector<1x16x16xf32>
    %413 = vector.shape_cast %412 : vector<1x16x16xf32> to vector<16x16xf32>
    %414 = vector.broadcast %411 : f32 to vector<16x16xf32>
    %415 = arith.mulf %414, %413 : vector<16x16xf32>
    %416 = arith.addf %410, %415 : vector<16x16xf32>
    %c67 = arith.constant 67 : index
    %417 = memref.load %arg1[%c67] : memref<98xf32, #tpu.memory_space<smem>>
    %c1_218 = arith.constant 1 : index
    %c2_219 = arith.constant 2 : index
    %c4_220 = arith.constant 4 : index
    %418 = vector.load %arg4[%c1_218, %c2_219, %c4_220] : memref<2x22x22xf32, #tpu.memory_space<vmem>>, vector<1x16x16xf32>
    %419 = vector.shape_cast %418 : vector<1x16x16xf32> to vector<16x16xf32>
    %420 = vector.broadcast %417 : f32 to vector<16x16xf32>
    %421 = arith.mulf %420, %419 : vector<16x16xf32>
    %422 = arith.addf %416, %421 : vector<16x16xf32>
    %c68 = arith.constant 68 : index
    %423 = memref.load %arg1[%c68] : memref<98xf32, #tpu.memory_space<smem>>
    %c1_221 = arith.constant 1 : index
    %c2_222 = arith.constant 2 : index
    %c5_223 = arith.constant 5 : index
    %424 = vector.load %arg4[%c1_221, %c2_222, %c5_223] : memref<2x22x22xf32, #tpu.memory_space<vmem>>, vector<1x16x16xf32>
    %425 = vector.shape_cast %424 : vector<1x16x16xf32> to vector<16x16xf32>
    %426 = vector.broadcast %423 : f32 to vector<16x16xf32>
    %427 = arith.mulf %426, %425 : vector<16x16xf32>
    %428 = arith.addf %422, %427 : vector<16x16xf32>
    %c69 = arith.constant 69 : index
    %429 = memref.load %arg1[%c69] : memref<98xf32, #tpu.memory_space<smem>>
    %c1_224 = arith.constant 1 : index
    %c2_225 = arith.constant 2 : index
    %c6_226 = arith.constant 6 : index
    %430 = vector.load %arg4[%c1_224, %c2_225, %c6_226] : memref<2x22x22xf32, #tpu.memory_space<vmem>>, vector<1x16x16xf32>
    %431 = vector.shape_cast %430 : vector<1x16x16xf32> to vector<16x16xf32>
    %432 = vector.broadcast %429 : f32 to vector<16x16xf32>
    %433 = arith.mulf %432, %431 : vector<16x16xf32>
    %434 = arith.addf %428, %433 : vector<16x16xf32>
    %c70 = arith.constant 70 : index
    %435 = memref.load %arg1[%c70] : memref<98xf32, #tpu.memory_space<smem>>
    %c1_227 = arith.constant 1 : index
    %c3_228 = arith.constant 3 : index
    %c0_229 = arith.constant 0 : index
    %436 = vector.load %arg4[%c1_227, %c3_228, %c0_229] : memref<2x22x22xf32, #tpu.memory_space<vmem>>, vector<1x16x16xf32>
    %437 = vector.shape_cast %436 : vector<1x16x16xf32> to vector<16x16xf32>
    %438 = vector.broadcast %435 : f32 to vector<16x16xf32>
    %439 = arith.mulf %438, %437 : vector<16x16xf32>
    %440 = arith.addf %434, %439 : vector<16x16xf32>
    %c71 = arith.constant 71 : index
    %441 = memref.load %arg1[%c71] : memref<98xf32, #tpu.memory_space<smem>>
    %c1_230 = arith.constant 1 : index
    %c3_231 = arith.constant 3 : index
    %c1_232 = arith.constant 1 : index
    %442 = vector.load %arg4[%c1_230, %c3_231, %c1_232] : memref<2x22x22xf32, #tpu.memory_space<vmem>>, vector<1x16x16xf32>
    %443 = vector.shape_cast %442 : vector<1x16x16xf32> to vector<16x16xf32>
    %444 = vector.broadcast %441 : f32 to vector<16x16xf32>
    %445 = arith.mulf %444, %443 : vector<16x16xf32>
    %446 = arith.addf %440, %445 : vector<16x16xf32>
    %c72 = arith.constant 72 : index
    %447 = memref.load %arg1[%c72] : memref<98xf32, #tpu.memory_space<smem>>
    %c1_233 = arith.constant 1 : index
    %c3_234 = arith.constant 3 : index
    %c2_235 = arith.constant 2 : index
    %448 = vector.load %arg4[%c1_233, %c3_234, %c2_235] : memref<2x22x22xf32, #tpu.memory_space<vmem>>, vector<1x16x16xf32>
    %449 = vector.shape_cast %448 : vector<1x16x16xf32> to vector<16x16xf32>
    %450 = vector.broadcast %447 : f32 to vector<16x16xf32>
    %451 = arith.mulf %450, %449 : vector<16x16xf32>
    %452 = arith.addf %446, %451 : vector<16x16xf32>
    %c73 = arith.constant 73 : index
    %453 = memref.load %arg1[%c73] : memref<98xf32, #tpu.memory_space<smem>>
    %c1_236 = arith.constant 1 : index
    %c3_237 = arith.constant 3 : index
    %c3_238 = arith.constant 3 : index
    %454 = vector.load %arg4[%c1_236, %c3_237, %c3_238] : memref<2x22x22xf32, #tpu.memory_space<vmem>>, vector<1x16x16xf32>
    %455 = vector.shape_cast %454 : vector<1x16x16xf32> to vector<16x16xf32>
    %456 = vector.broadcast %453 : f32 to vector<16x16xf32>
    %457 = arith.mulf %456, %455 : vector<16x16xf32>
    %458 = arith.addf %452, %457 : vector<16x16xf32>
    %c74 = arith.constant 74 : index
    %459 = memref.load %arg1[%c74] : memref<98xf32, #tpu.memory_space<smem>>
    %c1_239 = arith.constant 1 : index
    %c3_240 = arith.constant 3 : index
    %c4_241 = arith.constant 4 : index
    %460 = vector.load %arg4[%c1_239, %c3_240, %c4_241] : memref<2x22x22xf32, #tpu.memory_space<vmem>>, vector<1x16x16xf32>
    %461 = vector.shape_cast %460 : vector<1x16x16xf32> to vector<16x16xf32>
    %462 = vector.broadcast %459 : f32 to vector<16x16xf32>
    %463 = arith.mulf %462, %461 : vector<16x16xf32>
    %464 = arith.addf %458, %463 : vector<16x16xf32>
    %c75 = arith.constant 75 : index
    %465 = memref.load %arg1[%c75] : memref<98xf32, #tpu.memory_space<smem>>
    %c1_242 = arith.constant 1 : index
    %c3_243 = arith.constant 3 : index
    %c5_244 = arith.constant 5 : index
    %466 = vector.load %arg4[%c1_242, %c3_243, %c5_244] : memref<2x22x22xf32, #tpu.memory_space<vmem>>, vector<1x16x16xf32>
    %467 = vector.shape_cast %466 : vector<1x16x16xf32> to vector<16x16xf32>
    %468 = vector.broadcast %465 : f32 to vector<16x16xf32>
    %469 = arith.mulf %468, %467 : vector<16x16xf32>
    %470 = arith.addf %464, %469 : vector<16x16xf32>
    %c76 = arith.constant 76 : index
    %471 = memref.load %arg1[%c76] : memref<98xf32, #tpu.memory_space<smem>>
    %c1_245 = arith.constant 1 : index
    %c3_246 = arith.constant 3 : index
    %c6_247 = arith.constant 6 : index
    %472 = vector.load %arg4[%c1_245, %c3_246, %c6_247] : memref<2x22x22xf32, #tpu.memory_space<vmem>>, vector<1x16x16xf32>
    %473 = vector.shape_cast %472 : vector<1x16x16xf32> to vector<16x16xf32>
    %474 = vector.broadcast %471 : f32 to vector<16x16xf32>
    %475 = arith.mulf %474, %473 : vector<16x16xf32>
    %476 = arith.addf %470, %475 : vector<16x16xf32>
    %c77 = arith.constant 77 : index
    %477 = memref.load %arg1[%c77] : memref<98xf32, #tpu.memory_space<smem>>
    %c1_248 = arith.constant 1 : index
    %c4_249 = arith.constant 4 : index
    %c0_250 = arith.constant 0 : index
    %478 = vector.load %arg4[%c1_248, %c4_249, %c0_250] : memref<2x22x22xf32, #tpu.memory_space<vmem>>, vector<1x16x16xf32>
    %479 = vector.shape_cast %478 : vector<1x16x16xf32> to vector<16x16xf32>
    %480 = vector.broadcast %477 : f32 to vector<16x16xf32>
    %481 = arith.mulf %480, %479 : vector<16x16xf32>
    %482 = arith.addf %476, %481 : vector<16x16xf32>
    %c78 = arith.constant 78 : index
    %483 = memref.load %arg1[%c78] : memref<98xf32, #tpu.memory_space<smem>>
    %c1_251 = arith.constant 1 : index
    %c4_252 = arith.constant 4 : index
    %c1_253 = arith.constant 1 : index
    %484 = vector.load %arg4[%c1_251, %c4_252, %c1_253] : memref<2x22x22xf32, #tpu.memory_space<vmem>>, vector<1x16x16xf32>
    %485 = vector.shape_cast %484 : vector<1x16x16xf32> to vector<16x16xf32>
    %486 = vector.broadcast %483 : f32 to vector<16x16xf32>
    %487 = arith.mulf %486, %485 : vector<16x16xf32>
    %488 = arith.addf %482, %487 : vector<16x16xf32>
    %c79 = arith.constant 79 : index
    %489 = memref.load %arg1[%c79] : memref<98xf32, #tpu.memory_space<smem>>
    %c1_254 = arith.constant 1 : index
    %c4_255 = arith.constant 4 : index
    %c2_256 = arith.constant 2 : index
    %490 = vector.load %arg4[%c1_254, %c4_255, %c2_256] : memref<2x22x22xf32, #tpu.memory_space<vmem>>, vector<1x16x16xf32>
    %491 = vector.shape_cast %490 : vector<1x16x16xf32> to vector<16x16xf32>
    %492 = vector.broadcast %489 : f32 to vector<16x16xf32>
    %493 = arith.mulf %492, %491 : vector<16x16xf32>
    %494 = arith.addf %488, %493 : vector<16x16xf32>
    %c80 = arith.constant 80 : index
    %495 = memref.load %arg1[%c80] : memref<98xf32, #tpu.memory_space<smem>>
    %c1_257 = arith.constant 1 : index
    %c4_258 = arith.constant 4 : index
    %c3_259 = arith.constant 3 : index
    %496 = vector.load %arg4[%c1_257, %c4_258, %c3_259] : memref<2x22x22xf32, #tpu.memory_space<vmem>>, vector<1x16x16xf32>
    %497 = vector.shape_cast %496 : vector<1x16x16xf32> to vector<16x16xf32>
    %498 = vector.broadcast %495 : f32 to vector<16x16xf32>
    %499 = arith.mulf %498, %497 : vector<16x16xf32>
    %500 = arith.addf %494, %499 : vector<16x16xf32>
    %c81 = arith.constant 81 : index
    %501 = memref.load %arg1[%c81] : memref<98xf32, #tpu.memory_space<smem>>
    %c1_260 = arith.constant 1 : index
    %c4_261 = arith.constant 4 : index
    %c4_262 = arith.constant 4 : index
    %502 = vector.load %arg4[%c1_260, %c4_261, %c4_262] : memref<2x22x22xf32, #tpu.memory_space<vmem>>, vector<1x16x16xf32>
    %503 = vector.shape_cast %502 : vector<1x16x16xf32> to vector<16x16xf32>
    %504 = vector.broadcast %501 : f32 to vector<16x16xf32>
    %505 = arith.mulf %504, %503 : vector<16x16xf32>
    %506 = arith.addf %500, %505 : vector<16x16xf32>
    %c82 = arith.constant 82 : index
    %507 = memref.load %arg1[%c82] : memref<98xf32, #tpu.memory_space<smem>>
    %c1_263 = arith.constant 1 : index
    %c4_264 = arith.constant 4 : index
    %c5_265 = arith.constant 5 : index
    %508 = vector.load %arg4[%c1_263, %c4_264, %c5_265] : memref<2x22x22xf32, #tpu.memory_space<vmem>>, vector<1x16x16xf32>
    %509 = vector.shape_cast %508 : vector<1x16x16xf32> to vector<16x16xf32>
    %510 = vector.broadcast %507 : f32 to vector<16x16xf32>
    %511 = arith.mulf %510, %509 : vector<16x16xf32>
    %512 = arith.addf %506, %511 : vector<16x16xf32>
    %c83 = arith.constant 83 : index
    %513 = memref.load %arg1[%c83] : memref<98xf32, #tpu.memory_space<smem>>
    %c1_266 = arith.constant 1 : index
    %c4_267 = arith.constant 4 : index
    %c6_268 = arith.constant 6 : index
    %514 = vector.load %arg4[%c1_266, %c4_267, %c6_268] : memref<2x22x22xf32, #tpu.memory_space<vmem>>, vector<1x16x16xf32>
    %515 = vector.shape_cast %514 : vector<1x16x16xf32> to vector<16x16xf32>
    %516 = vector.broadcast %513 : f32 to vector<16x16xf32>
    %517 = arith.mulf %516, %515 : vector<16x16xf32>
    %518 = arith.addf %512, %517 : vector<16x16xf32>
    %c84 = arith.constant 84 : index
    %519 = memref.load %arg1[%c84] : memref<98xf32, #tpu.memory_space<smem>>
    %c1_269 = arith.constant 1 : index
    %c5_270 = arith.constant 5 : index
    %c0_271 = arith.constant 0 : index
    %520 = vector.load %arg4[%c1_269, %c5_270, %c0_271] : memref<2x22x22xf32, #tpu.memory_space<vmem>>, vector<1x16x16xf32>
    %521 = vector.shape_cast %520 : vector<1x16x16xf32> to vector<16x16xf32>
    %522 = vector.broadcast %519 : f32 to vector<16x16xf32>
    %523 = arith.mulf %522, %521 : vector<16x16xf32>
    %524 = arith.addf %518, %523 : vector<16x16xf32>
    %c85 = arith.constant 85 : index
    %525 = memref.load %arg1[%c85] : memref<98xf32, #tpu.memory_space<smem>>
    %c1_272 = arith.constant 1 : index
    %c5_273 = arith.constant 5 : index
    %c1_274 = arith.constant 1 : index
    %526 = vector.load %arg4[%c1_272, %c5_273, %c1_274] : memref<2x22x22xf32, #tpu.memory_space<vmem>>, vector<1x16x16xf32>
    %527 = vector.shape_cast %526 : vector<1x16x16xf32> to vector<16x16xf32>
    %528 = vector.broadcast %525 : f32 to vector<16x16xf32>
    %529 = arith.mulf %528, %527 : vector<16x16xf32>
    %530 = arith.addf %524, %529 : vector<16x16xf32>
    %c86 = arith.constant 86 : index
    %531 = memref.load %arg1[%c86] : memref<98xf32, #tpu.memory_space<smem>>
    %c1_275 = arith.constant 1 : index
    %c5_276 = arith.constant 5 : index
    %c2_277 = arith.constant 2 : index
    %532 = vector.load %arg4[%c1_275, %c5_276, %c2_277] : memref<2x22x22xf32, #tpu.memory_space<vmem>>, vector<1x16x16xf32>
    %533 = vector.shape_cast %532 : vector<1x16x16xf32> to vector<16x16xf32>
    %534 = vector.broadcast %531 : f32 to vector<16x16xf32>
    %535 = arith.mulf %534, %533 : vector<16x16xf32>
    %536 = arith.addf %530, %535 : vector<16x16xf32>
    %c87 = arith.constant 87 : index
    %537 = memref.load %arg1[%c87] : memref<98xf32, #tpu.memory_space<smem>>
    %c1_278 = arith.constant 1 : index
    %c5_279 = arith.constant 5 : index
    %c3_280 = arith.constant 3 : index
    %538 = vector.load %arg4[%c1_278, %c5_279, %c3_280] : memref<2x22x22xf32, #tpu.memory_space<vmem>>, vector<1x16x16xf32>
    %539 = vector.shape_cast %538 : vector<1x16x16xf32> to vector<16x16xf32>
    %540 = vector.broadcast %537 : f32 to vector<16x16xf32>
    %541 = arith.mulf %540, %539 : vector<16x16xf32>
    %542 = arith.addf %536, %541 : vector<16x16xf32>
    %c88 = arith.constant 88 : index
    %543 = memref.load %arg1[%c88] : memref<98xf32, #tpu.memory_space<smem>>
    %c1_281 = arith.constant 1 : index
    %c5_282 = arith.constant 5 : index
    %c4_283 = arith.constant 4 : index
    %544 = vector.load %arg4[%c1_281, %c5_282, %c4_283] : memref<2x22x22xf32, #tpu.memory_space<vmem>>, vector<1x16x16xf32>
    %545 = vector.shape_cast %544 : vector<1x16x16xf32> to vector<16x16xf32>
    %546 = vector.broadcast %543 : f32 to vector<16x16xf32>
    %547 = arith.mulf %546, %545 : vector<16x16xf32>
    %548 = arith.addf %542, %547 : vector<16x16xf32>
    %c89 = arith.constant 89 : index
    %549 = memref.load %arg1[%c89] : memref<98xf32, #tpu.memory_space<smem>>
    %c1_284 = arith.constant 1 : index
    %c5_285 = arith.constant 5 : index
    %c5_286 = arith.constant 5 : index
    %550 = vector.load %arg4[%c1_284, %c5_285, %c5_286] : memref<2x22x22xf32, #tpu.memory_space<vmem>>, vector<1x16x16xf32>
    %551 = vector.shape_cast %550 : vector<1x16x16xf32> to vector<16x16xf32>
    %552 = vector.broadcast %549 : f32 to vector<16x16xf32>
    %553 = arith.mulf %552, %551 : vector<16x16xf32>
    %554 = arith.addf %548, %553 : vector<16x16xf32>
    %c90 = arith.constant 90 : index
    %555 = memref.load %arg1[%c90] : memref<98xf32, #tpu.memory_space<smem>>
    %c1_287 = arith.constant 1 : index
    %c5_288 = arith.constant 5 : index
    %c6_289 = arith.constant 6 : index
    %556 = vector.load %arg4[%c1_287, %c5_288, %c6_289] : memref<2x22x22xf32, #tpu.memory_space<vmem>>, vector<1x16x16xf32>
    %557 = vector.shape_cast %556 : vector<1x16x16xf32> to vector<16x16xf32>
    %558 = vector.broadcast %555 : f32 to vector<16x16xf32>
    %559 = arith.mulf %558, %557 : vector<16x16xf32>
    %560 = arith.addf %554, %559 : vector<16x16xf32>
    %c91 = arith.constant 91 : index
    %561 = memref.load %arg1[%c91] : memref<98xf32, #tpu.memory_space<smem>>
    %c1_290 = arith.constant 1 : index
    %c6_291 = arith.constant 6 : index
    %c0_292 = arith.constant 0 : index
    %562 = vector.load %arg4[%c1_290, %c6_291, %c0_292] : memref<2x22x22xf32, #tpu.memory_space<vmem>>, vector<1x16x16xf32>
    %563 = vector.shape_cast %562 : vector<1x16x16xf32> to vector<16x16xf32>
    %564 = vector.broadcast %561 : f32 to vector<16x16xf32>
    %565 = arith.mulf %564, %563 : vector<16x16xf32>
    %566 = arith.addf %560, %565 : vector<16x16xf32>
    %c92 = arith.constant 92 : index
    %567 = memref.load %arg1[%c92] : memref<98xf32, #tpu.memory_space<smem>>
    %c1_293 = arith.constant 1 : index
    %c6_294 = arith.constant 6 : index
    %c1_295 = arith.constant 1 : index
    %568 = vector.load %arg4[%c1_293, %c6_294, %c1_295] : memref<2x22x22xf32, #tpu.memory_space<vmem>>, vector<1x16x16xf32>
    %569 = vector.shape_cast %568 : vector<1x16x16xf32> to vector<16x16xf32>
    %570 = vector.broadcast %567 : f32 to vector<16x16xf32>
    %571 = arith.mulf %570, %569 : vector<16x16xf32>
    %572 = arith.addf %566, %571 : vector<16x16xf32>
    %c93 = arith.constant 93 : index
    %573 = memref.load %arg1[%c93] : memref<98xf32, #tpu.memory_space<smem>>
    %c1_296 = arith.constant 1 : index
    %c6_297 = arith.constant 6 : index
    %c2_298 = arith.constant 2 : index
    %574 = vector.load %arg4[%c1_296, %c6_297, %c2_298] : memref<2x22x22xf32, #tpu.memory_space<vmem>>, vector<1x16x16xf32>
    %575 = vector.shape_cast %574 : vector<1x16x16xf32> to vector<16x16xf32>
    %576 = vector.broadcast %573 : f32 to vector<16x16xf32>
    %577 = arith.mulf %576, %575 : vector<16x16xf32>
    %578 = arith.addf %572, %577 : vector<16x16xf32>
    %c94 = arith.constant 94 : index
    %579 = memref.load %arg1[%c94] : memref<98xf32, #tpu.memory_space<smem>>
    %c1_299 = arith.constant 1 : index
    %c6_300 = arith.constant 6 : index
    %c3_301 = arith.constant 3 : index
    %580 = vector.load %arg4[%c1_299, %c6_300, %c3_301] : memref<2x22x22xf32, #tpu.memory_space<vmem>>, vector<1x16x16xf32>
    %581 = vector.shape_cast %580 : vector<1x16x16xf32> to vector<16x16xf32>
    %582 = vector.broadcast %579 : f32 to vector<16x16xf32>
    %583 = arith.mulf %582, %581 : vector<16x16xf32>
    %584 = arith.addf %578, %583 : vector<16x16xf32>
    %c95 = arith.constant 95 : index
    %585 = memref.load %arg1[%c95] : memref<98xf32, #tpu.memory_space<smem>>
    %c1_302 = arith.constant 1 : index
    %c6_303 = arith.constant 6 : index
    %c4_304 = arith.constant 4 : index
    %586 = vector.load %arg4[%c1_302, %c6_303, %c4_304] : memref<2x22x22xf32, #tpu.memory_space<vmem>>, vector<1x16x16xf32>
    %587 = vector.shape_cast %586 : vector<1x16x16xf32> to vector<16x16xf32>
    %588 = vector.broadcast %585 : f32 to vector<16x16xf32>
    %589 = arith.mulf %588, %587 : vector<16x16xf32>
    %590 = arith.addf %584, %589 : vector<16x16xf32>
    %c96 = arith.constant 96 : index
    %591 = memref.load %arg1[%c96] : memref<98xf32, #tpu.memory_space<smem>>
    %c1_305 = arith.constant 1 : index
    %c6_306 = arith.constant 6 : index
    %c5_307 = arith.constant 5 : index
    %592 = vector.load %arg4[%c1_305, %c6_306, %c5_307] : memref<2x22x22xf32, #tpu.memory_space<vmem>>, vector<1x16x16xf32>
    %593 = vector.shape_cast %592 : vector<1x16x16xf32> to vector<16x16xf32>
    %594 = vector.broadcast %591 : f32 to vector<16x16xf32>
    %595 = arith.mulf %594, %593 : vector<16x16xf32>
    %596 = arith.addf %590, %595 : vector<16x16xf32>
    %c97 = arith.constant 97 : index
    %597 = memref.load %arg1[%c97] : memref<98xf32, #tpu.memory_space<smem>>
    %c1_308 = arith.constant 1 : index
    %c6_309 = arith.constant 6 : index
    %c6_310 = arith.constant 6 : index
    %598 = vector.load %arg4[%c1_308, %c6_309, %c6_310] : memref<2x22x22xf32, #tpu.memory_space<vmem>>, vector<1x16x16xf32>
    %599 = vector.shape_cast %598 : vector<1x16x16xf32> to vector<16x16xf32>
    %600 = vector.broadcast %597 : f32 to vector<16x16xf32>
    %601 = arith.mulf %600, %599 : vector<16x16xf32>
    %602 = arith.addf %596, %601 : vector<16x16xf32>
    %cst_311 = arith.constant 0.000000e+00 : f32
    %603 = vector.broadcast %cst_311 : f32 to vector<16x16xf32>
    %604 = arith.subf %603, %602 : vector<16x16xf32>
    %605 = math.exp %604 : vector<16x16xf32>
    %cst_312 = arith.constant 1.000000e+00 : f32
    %606 = vector.broadcast %cst_312 : f32 to vector<16x16xf32>
    %607 = arith.addf %606, %605 : vector<16x16xf32>
    %cst_313 = arith.constant 1.000000e+00 : f32
    %608 = vector.broadcast %cst_313 : f32 to vector<16x16xf32>
    %609 = arith.divf %608, %607 : vector<16x16xf32>
    %c0_314 = arith.constant 0 : index
    %c0_315 = arith.constant 0 : index
    %c0_316 = arith.constant 0 : index
    %c0_317 = arith.constant 0 : index
    %610 = vector.load %arg3[%c0_314, %c0_315, %c0_316, %c0_317] : memref<1x1x16x16xf32, #tpu.memory_space<vmem>>, vector<1x1x16x16xf32>
    %611 = vector.shape_cast %610 : vector<1x1x16x16xf32> to vector<16x16xf32>
    %612 = vector.shape_cast %609 : vector<16x16xf32> to vector<1x1x16x16xf32>
    tpu.vector_store %arg3[%c0_314, %c0_315, %c0_316, %c0_317], %612 {strides = array<i32>} : memref<1x1x16x16xf32, #tpu.memory_space<vmem>>, vector<1x1x16x16xf32>,
    return
  }
  func.func @transform_0(%arg0: i32) -> i32 {
    %c0_i32 = arith.constant 0 : i32
    %c0_i32_0 = arith.constant 0 : i32
    return %c0_i32 : i32
  }
  func.func @transform_1(%arg0: i32) -> (i32, i32, i32, i32) {
    %c0_i32 = arith.constant 0 : i32
    %c0_i32_0 = arith.constant 0 : i32
    %c0_i32_1 = arith.constant 0 : i32
    %c0_i32_2 = arith.constant 0 : i32
    return %arg0, %c0_i32, %c0_i32_0, %c0_i32_1 : i32, i32, i32, i32
  }
  func.func @transform_2(%arg0: i32) -> (i32, i32, i32, i32) {
    %c0_i32 = arith.constant 0 : i32
    %c0_i32_0 = arith.constant 0 : i32
    %c0_i32_1 = arith.constant 0 : i32
    %c0_i32_2 = arith.constant 0 : i32
    return %arg0, %c0_i32, %c0_i32_0, %c0_i32_1 : i32, i32, i32, i32
  }
}

</mosaic_0001>

<llo_original>
// kernel: tpu_custom_call.1
$region0: #{tpu_custom_call.1}
  #allocation0 [shape = 'u32[]', space=smem, size = 0x4, offset = 0x4, fixed_abs, tag = 'smem constant byte address 0x4 - core index']
  #allocation1 [shape = 'u32[144,128]{1,0:T(1,128)}', space=vmem, size = 0x12000, scoped, tag = 'internal scratch']
  #allocation2 [shape = 'f32[2,22,22]{2,1,0:T(8,128)}', space=vmem, size = 0x6000, scoped, tag = 'scratch operand']
  %s0 = inlined_call_operand.hbm [shape: f32[98], index: 0, kind: input, shape index: {}]
  %s1 = inlined_call_operand.hbm [shape: f32[2,4,16,16], index: 1, kind: input, shape index: {}]
  %s2 = inlined_call_operand.hbm [shape: f32[2,1,16,16], index: 2, kind: output, shape index: {}]
  %s3 = sld [smem:[#allocation0]]
  $region49: #{tpu_custom_call.1} parent=0
    _
  %s5 = ssub.s32 1, %s3
  %s6 = scalar_select 0, %s5, %s3
  $region1: #{tpu_custom_call.1} parent=0
    #allocation3 [shape = 'u8[512]{0}', space=smem, size = 0x200, scoped, tag = 'input window, operand 0, single buffered']
    #allocation4 [shape = 's32[2]{0}', space=sflag, size = 0x8, scoped, tag = 'scoped memory for tpu_custom_call.1']
    #allocation5 [shape = 's32[2]{0}', space=sflag, size = 0x8, scoped, tag = 'scoped memory for tpu_custom_call.1']
    #allocation6 [shape = 's32[2]{0}', space=sflag, size = 0x8, scoped, tag = 'scoped memory for tpu_custom_call.1']
    #allocation7 [shape = 'u8[65536]{0}', space=vmem, size = 0x10000, scoped, tag = 'input window, operand 1']
    #allocation8 [shape = 'u8[16384]{0}', space=vmem, size = 0x4000, scoped, tag = 'output window, operand 0']
    %7 = vsyncpa [#allocation6], 0
    %8 = vsyncpa [#allocation4], 0
    %s9 = scalar_lea.sflag [#allocation4], 1
    %10 = vsyncpa %s9, 0
    %11 = vsyncpa [#allocation5], 0
    %s12 = scalar_lea.sflag [#allocation5], 1
    %13 = vsyncpa %s12, 0
    loop: start=0, step=1, limit=4
    $region2: #{tpu_custom_call.1} parent=1 // loop_pre_header
      _
    $region3: #{tpu_custom_call.1} parent=1 // loop_header
      %s15 = sphi 0, %s19
      %p16 = scmp.ge.s32.totalorder %s15, 4
      %s23 = sphi 0, %s23
      %s25 = sphi 0, %s23
      %s26 = sphi 0, %s25
      %s40 = sphi 0, %s26
      %s46 = sphi 0, %s48
      %s49 = sphi 0, %s46
      %s50 = sphi 0, %s49
      %s66 = sphi 0, %s50
      %s72 = sphi 0, %s74
      %s75 = sphi 0, %s72
      %s76 = sphi 0, %s75
      %s92 = sphi 0, %s76
    $region4: #{tpu_custom_call.1} parent=1 // loop_header_branch
      %18 = sbr.rel (%p16) target = $region8
    $region5: #{tpu_custom_call.1} parent=1 // loop_body
      %s20 = ssub.s32 %s15, 1
      %s21 = ssub.s32 %s15, 2
      %s22 = sadd.s32 %s15, 1
      %s24 = sadd.s32 %s23, 1
      %p27 = scmp.eq.s32.totalorder %s15, 1
      %p28 = scmp.ne.s32.totalorder %s23, %s25
      %p29 = scmp.eq.s32.totalorder %s15, 0
      %p30 = por %p28, %p29
      %p31 = scmp.ne.s32.totalorder %s23, %s25
      %p32 = scmp.eq.s32.totalorder %s20, 1
      %p33 = por %p31, %p32
      %p34 = scmp.ne.s32.totalorder %s25, %s26
      %p35 = scmp.eq.s32.totalorder %s20, 0
      %p36 = por %p34, %p35
      %p37 = scmp.ne.s32.totalorder %s25, %s26
      %p38 = scmp.eq.s32.totalorder %s21, 1
      %p39 = por %p37, %p38
      %p41 = scmp.ne.s32.totalorder %s26, %s40
      %p42 = scmp.eq.s32.totalorder %s21, 0
      %p43 = por %p41, %p42
      %s44 = ssub.s32 %s15, %s22
      %p45 = scmp.eq.s32.totalorder %s44, 0
      %s47 = sadd.s32 %s46, 1
      %s48 = scalar_select %p45, %s46, %s47
      %p51 = pneg %p45
      %p52 = scmp.eq.s32.totalorder %s15, 1
      %p53 = por %p51, %p52
      %p54 = scmp.ne.s32.totalorder %s46, %s49
      %p55 = scmp.eq.s32.totalorder %s15, 0
      %p56 = por %p54, %p55
      %p57 = scmp.ne.s32.totalorder %s46, %s49
      %p58 = scmp.eq.s32.totalorder %s20, 1
      %p59 = por %p57, %p58
      %p60 = scmp.ne.s32.totalorder %s49, %s50
      %p61 = scmp.eq.s32.totalorder %s20, 0
      %p62 = por %p60, %p61
      %p63 = scmp.ne.s32.totalorder %s49, %s50
      %p64 = scmp.eq.s32.totalorder %s21, 1
      %p65 = por %p63, %p64
      %p67 = scmp.ne.s32.totalorder %s50, %s66
      %p68 = scmp.eq.s32.totalorder %s21, 0
      %p69 = por %p67, %p68
      %s70 = ssub.s32 %s15, %s22
      %p71 = scmp.eq.s32.totalorder %s70, 0
      %s73 = sadd.s32 %s72, 1
      %s74 = scalar_select %p71, %s72, %s73
      %p77 = pneg %p71
      %p78 = scmp.eq.s32.totalorder %s15, 1
      %p79 = por %p77, %p78
      %p80 = scmp.ne.s32.totalorder %s72, %s75
      %p81 = scmp.eq.s32.totalorder %s15, 0
      %p82 = por %p80, %p81
      %p83 = scmp.ne.s32.totalorder %s72, %s75
      %p84 = scmp.eq.s32.totalorder %s20, 1
      %p85 = por %p83, %p84
      %p86 = scmp.ne.s32.totalorder %s75, %s76
      %p87 = scmp.eq.s32.totalorder %s20, 0
      %p88 = por %p86, %p87
      %p89 = scmp.ne.s32.totalorder %s75, %s76
      %p90 = scmp.eq.s32.totalorder %s21, 1
      %p91 = por %p89, %p90
      %p93 = scmp.ne.s32.totalorder %s76, %s92
      %p94 = scmp.eq.s32.totalorder %s21, 0
      %p95 = por %p93, %p94
      %p96 = scmp.le.s32.totalorder 1, %s15
      %p97 = scmp.lt.s32.totalorder %s15, 3
      %p98 = pnand %p96, %p97
      %p99 = pneg %p98
      // Predicated region
      $region9: #{tpu_custom_call.1} parent=5 // pred_check
        _
      $region10: #{tpu_custom_call.1} parent=5 // pred_check_branch
        %101 = sbr.rel (%p98) target = $region12
      $region11: #{tpu_custom_call.1} parent=5 // pred_region
        %s102 = ssub.s32 %s15, 1
        // Predicated region
        $region13: #{tpu_custom_call.1} parent=11 // pred_check
          %p103 = pneg %p36
        $region14: #{tpu_custom_call.1} parent=11 // pred_check_branch
          %105 = sbr.rel (%p103) target = $region16
        $region15: #{tpu_custom_call.1} parent=11 // pred_region
          %s107 = ssub.s32 16, 16
          %108 = vsyncadd [#allocation6], %s107
          %111 = dma.hbm_to_smem %s0, 16, [#allocation3], [#allocation6]
        $region16: #{tpu_custom_call.1} parent=11 // pred_fallthru
          _
      $region12: #{tpu_custom_call.1} parent=5 // pred_fallthru
        _
      %p112 = scmp.lt.s32.totalorder %s15, 2
      // Predicated region
      $region17: #{tpu_custom_call.1} parent=5 // pred_check
        %p113 = pneg %p112
      $region18: #{tpu_custom_call.1} parent=5 // pred_check_branch
        %115 = sbr.rel (%p113) target = $region20
      $region19: #{tpu_custom_call.1} parent=5 // pred_region
        // Predicated region
        $region21: #{tpu_custom_call.1} parent=19 // pred_check
          %p116 = pneg %p56
        $region22: #{tpu_custom_call.1} parent=19 // pred_check_branch
          %118 = sbr.rel (%p116) target = $region24
        $region23: #{tpu_custom_call.1} parent=19 // pred_region
          %s119 = sand.u32 %s46, 1
          %s120 = scalar_lea.sflag [#allocation4], %s119
          %s121 = sand.u32 %s46, 1
          %s122 = smul.addr %s121, 64
          %s123 = scalar_lea.vmem [#allocation7], %s122
          %s125 = ssub.s32 1024, 1024
          %126 = vsyncadd %s120, %s125
          %s127 = smul.addr %s15, 8
          %s128 = smul.addr %s127, 128
          %s129 = scalar_lea.hbm %s1, %s128
          %s130 = sshll.u32 %s123, 4
          %s131 = int_to_ptr.vmem [resolvable:$true] %s130
          %136 = dma.hbm_to_vmem [thread:$0]  %s129, 1024, %s131, %s120, 128, 128, 8
        $region24: #{tpu_custom_call.1} parent=19 // pred_fallthru
          _
      $region20: #{tpu_custom_call.1} parent=5 // pred_fallthru
        _
      %p137 = scmp.le.s32.totalorder 1, %s15
      %p138 = scmp.lt.s32.totalorder %s15, 3
      %p139 = pnand %p137, %p138
      %p140 = pneg %p139
      // Predicated region
      $region25: #{tpu_custom_call.1} parent=5 // pred_check
        _
      $region26: #{tpu_custom_call.1} parent=5 // pred_check_branch
        %142 = sbr.rel (%p139) target = $region28
      $region27: #{tpu_custom_call.1} parent=5 // pred_region
        %s143 = ssub.s32 %s15, 1
        // Predicated region
        $region29: #{tpu_custom_call.1} parent=27 // pred_check
          %p144 = pneg %p36
        $region30: #{tpu_custom_call.1} parent=27 // pred_check_branch
          %146 = sbr.rel (%p144) target = $region32
        $region31: #{tpu_custom_call.1} parent=27 // pred_region
          %147 = dma.done [#allocation6], 16
        $region32: #{tpu_custom_call.1} parent=27 // pred_fallthru
          _
        %s148 = sand.u32 %s49, 1
        %s149 = scalar_lea.sflag [#allocation4], %s148
        %s150 = sand.u32 %s49, 1
        %s151 = smul.addr %s150, 64
        %s152 = scalar_lea.vmem [#allocation7], %s151
        // Predicated region
        $region33: #{tpu_custom_call.1} parent=27 // pred_check
          %p153 = pneg %p62
        $region34: #{tpu_custom_call.1} parent=27 // pred_check_branch
          %155 = sbr.rel (%p153) target = $region36
        $region35: #{tpu_custom_call.1} parent=27 // pred_region
          %156 = dma.done %s149, 1024
        $region36: #{tpu_custom_call.1} parent=27 // pred_fallthru
          _
        %157 = sfence
        %p158 = pneg %p36
        %p159 = pneg %p33
        %s160 = sand.u32 %s49, 1
        %s161 = scalar_lea.sflag [#allocation4], %s160
        %s162 = sand.u32 %s49, 1
        %s163 = smul.addr %s162, 64
        %s164 = scalar_lea.vmem [#allocation7], %s163
        %p165 = pneg %p62
        %p166 = pneg %p59
        %p167 = pneg %p88
        %p168 = pneg %p85
        %s169 = sand.u32 %s75, 1
        %s170 = scalar_lea.sflag [#allocation5], %s169
        %s171 = sand.u32 %s75, 1
        %s172 = smul.addr %s171, 16
        %s173 = scalar_lea.vmem [#allocation8], %s172
        %v174 = vld [vmem:[%s152] sm:$0xff]
        %v175 = vld [vmem:[%s152 + $0x8] sm:$0xff]
        %v176 = vld [vmem:[%s152 + $0x10] sm:$0xff]
        %v177 = vld [vmem:[%s152 + $0x18] sm:$0xff]
        %v178 = vld [vmem:[%s152 + $0x20] sm:$0xff]
        %v179 = vld [vmem:[%s152 + $0x28] sm:$0xff]
        %v180 = vld [vmem:[%s152 + $0x30] sm:$0xff]
        %v181 = vld [vmem:[%s152 + $0x38] sm:$0xff]
        %vm182 = vcmask 179200
        %183 = vst.msk [vmem:[#allocation2] sm:$0xff] %vm182, 0.0
        %184 = vst.msk [vmem:[#allocation2 + $0x8] sm:$0xff] %vm182, 0.0
        %vm185 = vcmask 177152
        %186 = vst.msk [vmem:[#allocation2 + $0x10] sm:$0x3f] %vm185, 0.0
        %187 = vst.msk [vmem:[#allocation2 + $0x18] sm:$0xff] %vm182, 0.0
        %188 = vst.msk [vmem:[#allocation2 + $0x20] sm:$0xff] %vm182, 0.0
        %189 = vst.msk [vmem:[#allocation2 + $0x28] sm:$0x3f] %vm185, 0.0
        %vm190 = vcmask 130048
        %v191 = vsel %vm190, %v174, 0.0
        %v192 = vsel %vm190, %v176, 0.0
        %v193 = vadd.f32 %v191, %v192
        %v194 = vsel %vm190, %v178, 0.0
        %v195 = vadd.f32 %v193, %v194
        %v196 = vsel %vm190, %v180, 0.0
        %v197 = vadd.f32 %v195, %v196
        %v198 = vsel %vm190, %v175, 0.0
        %v199 = vsel %vm190, %v177, 0.0
        %v200 = vadd.f32 %v198, %v199
        %v201 = vsel %vm190, %v179, 0.0
        %v202 = vadd.f32 %v200, %v201
        %v203 = vsel %vm190, %v181, 0.0
        %v204 = vadd.f32 %v202, %v203
        %v205 = vmul.f32 %v197, 0.25
        %v206 = vmul.f32 %v204, 0.25
        %209 = vrot.lane.b32.xlu0 %v205, 3
        %v210 = vpop.permute.xlu0 %209
        %211 = vrot.lane.b32.xlu0 %v206, 3
        %v212 = vpop.permute.xlu0 %211
        %vm215 = vcmask 154648
        %216 = vst.msk [vmem:[#allocation2 + $0x3] sm:$0xff] %vm215, %v210
        %217 = vst.msk [vmem:[#allocation2 + $0xb] sm:$0xff] %vm215, %v212
        %v218 = vsel %vm190, %v174, -inf
        %v219 = vsel %vm190, %v176, -inf
        %v220 = vsel %vm190, %v178, -inf
        %v221 = vmax.f32 %v218, %v220
        %v222 = vsel %vm190, %v180, -inf
        %v223 = vmax.f32 %v219, %v222
        %v224 = vmax.f32 %v221, %v223
        %v225 = vsel %vm190, %v175, -inf
        %v226 = vsel %vm190, %v177, -inf
        %v227 = vsel %vm190, %v179, -inf
        %v228 = vmax.f32 %v225, %v227
        %v229 = vsel %vm190, %v181, -inf
        %v230 = vmax.f32 %v226, %v229
        %v231 = vmax.f32 %v228, %v230
        %234 = vrot.lane.b32.xlu0 %v224, 3
        %v235 = vpop.permute.xlu0 %234
        %236 = vrot.lane.b32.xlu0 %v231, 3
        %v237 = vpop.permute.xlu0 %236
        %s240 = scalar_lea.vmem [#allocation2], 24
        %241 = vst.msk [vmem:[%s240 + $0x3] sm:$0xff] %vm215, %v235
        %242 = vst.msk [vmem:[%s240 + $0xb] sm:$0xff] %vm215, %v237
        %s243 = sld [smem:[#allocation3]]
        %v244 = vld [vmem:[#allocation2] sm:$0xff]
        %v245 = vld [vmem:[#allocation2 + $0x8] sm:$0xff]
        %v246 = vstv %s243
        %v247 = vmul.f32 %v246, %v244
        %v248 = vmul.f32 %v246, %v245
        %v249 = vadd.f32 %v247, 0.0
        %v250 = vadd.f32 %v248, 0.0
        %s251 = sld [smem:[#allocation3 + $0x1]]
        %v252 = vstv %s251
        %v253 = vmul.f32 %v252, %v244
        %v254 = vmul.f32 %v252, %v245
        %257 = vrot.lane.b32.xlu0 %v253, 127
        %v258 = vpop.permute.xlu0 %257
        %259 = vrot.lane.b32.xlu0 %v254, 127
        %v260 = vpop.permute.xlu0 %259
        %v263 = vadd.f32 %v249, %v258
        %v264 = vadd.f32 %v250, %v260
        %s265 = sld [smem:[#allocation3 + $0x2]]
        %v266 = vstv %s265
        %v267 = vmul.f32 %v266, %v244
        %v268 = vmul.f32 %v266, %v245
        %271 = vrot.lane.b32.xlu0 %v267, 126
        %v272 = vpop.permute.xlu0 %271
        %273 = vrot.lane.b32.xlu0 %v268, 126
        %v274 = vpop.permute.xlu0 %273
        %v277 = vadd.f32 %v263, %v272
        %v278 = vadd.f32 %v264, %v274
        %s279 = sld [smem:[#allocation3 + $0x3]]
        %v280 = vstv %s279
        %v281 = vmul.f32 %v280, %v244
        %v282 = vmul.f32 %v280, %v245
        %285 = vrot.lane.b32.xlu0 %v281, 125
        %v286 = vpop.permute.xlu0 %285
        %287 = vrot.lane.b32.xlu0 %v282, 125
        %v288 = vpop.permute.xlu0 %287
        %v291 = vadd.f32 %v277, %v286
        %v292 = vadd.f32 %v278, %v288
        %s293 = sld [smem:[#allocation3 + $0x4]]
        %v294 = vstv %s293
        %v295 = vmul.f32 %v294, %v244
        %v296 = vmul.f32 %v294, %v245
        %299 = vrot.lane.b32.xlu0 %v295, 124
        %v300 = vpop.permute.xlu0 %299
        %301 = vrot.lane.b32.xlu0 %v296, 124
        %v302 = vpop.permute.xlu0 %301
        %v305 = vadd.f32 %v291, %v300
        %v306 = vadd.f32 %v292, %v302
        %s307 = sld [smem:[#allocation3 + $0x5]]
        %v308 = vstv %s307
        %v309 = vmul.f32 %v308, %v244
        %v310 = vmul.f32 %v308, %v245
        %313 = vrot.lane.b32.xlu0 %v309, 123
        %v314 = vpop.permute.xlu0 %313
        %315 = vrot.lane.b32.xlu0 %v310, 123
        %v316 = vpop.permute.xlu0 %315
        %v319 = vadd.f32 %v305, %v314
        %v320 = vadd.f32 %v306, %v316
        %s321 = sld [smem:[#allocation3 + $0x6]]
        %v322 = vstv %s321
        %v323 = vmul.f32 %v322, %v244
        %v324 = vmul.f32 %v322, %v245
        %327 = vrot.lane.b32.xlu0 %v323, 122
        %v328 = vpop.permute.xlu0 %327
        %329 = vrot.lane.b32.xlu0 %v324, 122
        %v330 = vpop.permute.xlu0 %329
        %v333 = vadd.f32 %v319, %v328
        %v334 = vadd.f32 %v320, %v330
        %s335 = sld [smem:[#allocation3 + $0x7]]
        %v336 = vld [vmem:[#allocation2 + $0x1] sm:$0xff]
        %v337 = vld [vmem:[#allocation2 + $0x9] sm:$0xff]
        %v338 = vstv %s335
        %v339 = vmul.f32 %v338, %v336
        %v340 = vmul.f32 %v338, %v337
        %v341 = vadd.f32 %v333, %v339
        %v342 = vadd.f32 %v334, %v340
        %s343 = sld [smem:[#allocation3 + $0x8]]
        %v344 = vstv %s343
        %v345 = vmul.f32 %v344, %v336
        %v346 = vmul.f32 %v344, %v337
        %349 = vrot.lane.b32.xlu0 %v345, 127
        %v350 = vpop.permute.xlu0 %349
        %351 = vrot.lane.b32.xlu0 %v346, 127
        %v352 = vpop.permute.xlu0 %351
        %v355 = vadd.f32 %v341, %v350
        %v356 = vadd.f32 %v342, %v352
        %s357 = sld [smem:[#allocation3 + $0x9]]
        %v358 = vstv %s357
        %v359 = vmul.f32 %v358, %v336
        %v360 = vmul.f32 %v358, %v337
        %363 = vrot.lane.b32.xlu0 %v359, 126
        %v364 = vpop.permute.xlu0 %363
        %365 = vrot.lane.b32.xlu0 %v360, 126
        %v366 = vpop.permute.xlu0 %365
        %v369 = vadd.f32 %v355, %v364
        %v370 = vadd.f32 %v356, %v366
        %s371 = sld [smem:[#allocation3 + $0xa]]
        %v372 = vstv %s371
        %v373 = vmul.f32 %v372, %v336
        %v374 = vmul.f32 %v372, %v337
        %377 = vrot.lane.b32.xlu0 %v373, 125
        %v378 = vpop.permute.xlu0 %377
        %379 = vrot.lane.b32.xlu0 %v374, 125
        %v380 = vpop.permute.xlu0 %379
        %v383 = vadd.f32 %v369, %v378
        %v384 = vadd.f32 %v370, %v380
        %s385 = sld [smem:[#allocation3 + $0xb]]
        %v386 = vstv %s385
        %v387 = vmul.f32 %v386, %v336
        %v388 = vmul.f32 %v386, %v337
        %391 = vrot.lane.b32.xlu0 %v387, 124
        %v392 = vpop.permute.xlu0 %391
        %393 = vrot.lane.b32.xlu0 %v388, 124
        %v394 = vpop.permute.xlu0 %393
        %v397 = vadd.f32 %v383, %v392
        %v398 = vadd.f32 %v384, %v394
        %s399 = sld [smem:[#allocation3 + $0xc]]
        %v400 = vstv %s399
        %v401 = vmul.f32 %v400, %v336
        %v402 = vmul.f32 %v400, %v337
        %405 = vrot.lane.b32.xlu0 %v401, 123
        %v406 = vpop.permute.xlu0 %405
        %407 = vrot.lane.b32.xlu0 %v402, 123
        %v408 = vpop.permute.xlu0 %407
        %v411 = vadd.f32 %v397, %v406
        %v412 = vadd.f32 %v398, %v408
        %s413 = sld [smem:[#allocation3 + $0xd]]
        %v414 = vstv %s413
        %v415 = vmul.f32 %v414, %v336
        %v416 = vmul.f32 %v414, %v337
        %419 = vrot.lane.b32.xlu0 %v415, 122
        %v420 = vpop.permute.xlu0 %419
        %421 = vrot.lane.b32.xlu0 %v416, 122
        %v422 = vpop.permute.xlu0 %421
        %v425 = vadd.f32 %v411, %v420
        %v426 = vadd.f32 %v412, %v422
        %s427 = sld [smem:[#allocation3 + $0xe]]
        %v428 = vld [vmem:[#allocation2 + $0x2] sm:$0xff]
        %v429 = vld [vmem:[#allocation2 + $0xa] sm:$0xff]
        %v430 = vstv %s427
        %v431 = vmul.f32 %v430, %v428
        %v432 = vmul.f32 %v430, %v429
        %v433 = vadd.f32 %v425, %v431
        %v434 = vadd.f32 %v426, %v432
        %s435 = sld [smem:[#allocation3 + $0xf]]
        %v436 = vstv %s435
        %v437 = vmul.f32 %v436, %v428
        %v438 = vmul.f32 %v436, %v429
        %441 = vrot.lane.b32.xlu0 %v437, 127
        %v442 = vpop.permute.xlu0 %441
        %443 = vrot.lane.b32.xlu0 %v438, 127
        %v444 = vpop.permute.xlu0 %443
        %v447 = vadd.f32 %v433, %v442
        %v448 = vadd.f32 %v434, %v444
        %s449 = sld [smem:[#allocation3 + $0x10]]
        %v450 = vstv %s449
        %v451 = vmul.f32 %v450, %v428
        %v452 = vmul.f32 %v450, %v429
        %455 = vrot.lane.b32.xlu0 %v451, 126
        %v456 = vpop.permute.xlu0 %455
        %457 = vrot.lane.b32.xlu0 %v452, 126
        %v458 = vpop.permute.xlu0 %457
        %v461 = vadd.f32 %v447, %v456
        %v462 = vadd.f32 %v448, %v458
        %s463 = sld [smem:[#allocation3 + $0x11]]
        %v464 = vstv %s463
        %v465 = vmul.f32 %v464, %v428
        %v466 = vmul.f32 %v464, %v429
        %469 = vrot.lane.b32.xlu0 %v465, 125
        %v470 = vpop.permute.xlu0 %469
        %471 = vrot.lane.b32.xlu0 %v466, 125
        %v472 = vpop.permute.xlu0 %471
        %v475 = vadd.f32 %v461, %v470
        %v476 = vadd.f32 %v462, %v472
        %s477 = sld [smem:[#allocation3 + $0x12]]
        %v478 = vstv %s477
        %v479 = vmul.f32 %v478, %v428
        %v480 = vmul.f32 %v478, %v429
        %483 = vrot.lane.b32.xlu0 %v479, 124
        %v484 = vpop.permute.xlu0 %483
        %485 = vrot.lane.b32.xlu0 %v480, 124
        %v486 = vpop.permute.xlu0 %485
        %v489 = vadd.f32 %v475, %v484
        %v490 = vadd.f32 %v476, %v486
        %s491 = sld [smem:[#allocation3 + $0x13]]
        %v492 = vstv %s491
        %v493 = vmul.f32 %v492, %v428
        %v494 = vmul.f32 %v492, %v429
        %497 = vrot.lane.b32.xlu0 %v493, 123
        %v498 = vpop.permute.xlu0 %497
        %499 = vrot.lane.b32.xlu0 %v494, 123
        %v500 = vpop.permute.xlu0 %499
        %v503 = vadd.f32 %v489, %v498
        %v504 = vadd.f32 %v490, %v500
        %s505 = sld [smem:[#allocation3 + $0x14]]
        %v506 = vstv %s505
        %v507 = vmul.f32 %v506, %v428
        %v508 = vmul.f32 %v506, %v429
        %511 = vrot.lane.b32.xlu0 %v507, 122
        %v512 = vpop.permute.xlu0 %511
        %513 = vrot.lane.b32.xlu0 %v508, 122
        %v514 = vpop.permute.xlu0 %513
        %v517 = vadd.f32 %v503, %v512
        %v518 = vadd.f32 %v504, %v514
        %s519 = sld [smem:[#allocation3 + $0x15]]
        %v520 = vld [vmem:[#allocation2 + $0x3] sm:$0xff]
        %v521 = vld [vmem:[#allocation2 + $0xb] sm:$0xff]
        %v522 = vstv %s519
        %v523 = vmul.f32 %v522, %v520
        %v524 = vmul.f32 %v522, %v521
        %v525 = vadd.f32 %v517, %v523
        %v526 = vadd.f32 %v518, %v524
        %s527 = sld [smem:[#allocation3 + $0x16]]
        %v528 = vstv %s527
        %v529 = vmul.f32 %v528, %v520
        %v530 = vmul.f32 %v528, %v521
        %533 = vrot.lane.b32.xlu0 %v529, 127
        %v534 = vpop.permute.xlu0 %533
        %535 = vrot.lane.b32.xlu0 %v530, 127
        %v536 = vpop.permute.xlu0 %535
        %v539 = vadd.f32 %v525, %v534
        %v540 = vadd.f32 %v526, %v536
        %s541 = sld [smem:[#allocation3 + $0x17]]
        %v542 = vstv %s541
        %v543 = vmul.f32 %v542, %v520
        %v544 = vmul.f32 %v542, %v521
        %547 = vrot.lane.b32.xlu0 %v543, 126
        %v548 = vpop.permute.xlu0 %547
        %549 = vrot.lane.b32.xlu0 %v544, 126
        %v550 = vpop.permute.xlu0 %549
        %v553 = vadd.f32 %v539, %v548
        %v554 = vadd.f32 %v540, %v550
        %s555 = sld [smem:[#allocation3 + $0x18]]
        %v556 = vstv %s555
        %v557 = vmul.f32 %v556, %v520
        %v558 = vmul.f32 %v556, %v521
        %561 = vrot.lane.b32.xlu0 %v557, 125
        %v562 = vpop.permute.xlu0 %561
        %563 = vrot.lane.b32.xlu0 %v558, 125
        %v564 = vpop.permute.xlu0 %563
        %v567 = vadd.f32 %v553, %v562
        %v568 = vadd.f32 %v554, %v564
        %s569 = sld [smem:[#allocation3 + $0x19]]
        %v570 = vstv %s569
        %v571 = vmul.f32 %v570, %v520
        %v572 = vmul.f32 %v570, %v521
        %575 = vrot.lane.b32.xlu0 %v571, 124
        %v576 = vpop.permute.xlu0 %575
        %577 = vrot.lane.b32.xlu0 %v572, 124
        %v578 = vpop.permute.xlu0 %577
        %v581 = vadd.f32 %v567, %v576
        %v582 = vadd.f32 %v568, %v578
        %s583 = sld [smem:[#allocation3 + $0x1a]]
        %v584 = vstv %s583
        %v585 = vmul.f32 %v584, %v520
        %v586 = vmul.f32 %v584, %v521
        %589 = vrot.lane.b32.xlu0 %v585, 123
        %v590 = vpop.permute.xlu0 %589
        %591 = vrot.lane.b32.xlu0 %v586, 123
        %v592 = vpop.permute.xlu0 %591
        %v595 = vadd.f32 %v581, %v590
        %v596 = vadd.f32 %v582, %v592
        %s597 = sld [smem:[#allocation3 + $0x1b]]
        %v598 = vstv %s597
        %v599 = vmul.f32 %v598, %v520
        %v600 = vmul.f32 %v598, %v521
        %603 = vrot.lane.b32.xlu0 %v599, 122
        %v604 = vpop.permute.xlu0 %603
        %605 = vrot.lane.b32.xlu0 %v600, 122
        %v606 = vpop.permute.xlu0 %605
        %v609 = vadd.f32 %v595, %v604
        %v610 = vadd.f32 %v596, %v606
        %s611 = sld [smem:[#allocation3 + $0x1c]]
        %v612 = vld [vmem:[#allocation2 + $0x4] sm:$0xff]
        %v613 = vld [vmem:[#allocation2 + $0xc] sm:$0xff]
        %v614 = vstv %s611
        %v615 = vmul.f32 %v614, %v612
        %v616 = vmul.f32 %v614, %v613
        %v617 = vadd.f32 %v609, %v615
        %v618 = vadd.f32 %v610, %v616
        %s619 = sld [smem:[#allocation3 + $0x1d]]
        %v620 = vstv %s619
        %v621 = vmul.f32 %v620, %v612
        %v622 = vmul.f32 %v620, %v613
        %625 = vrot.lane.b32.xlu0 %v621, 127
        %v626 = vpop.permute.xlu0 %625
        %627 = vrot.lane.b32.xlu0 %v622, 127
        %v628 = vpop.permute.xlu0 %627
        %v631 = vadd.f32 %v617, %v626
        %v632 = vadd.f32 %v618, %v628
        %s633 = sld [smem:[#allocation3 + $0x1e]]
        %v634 = vstv %s633
        %v635 = vmul.f32 %v634, %v612
        %v636 = vmul.f32 %v634, %v613
        %639 = vrot.lane.b32.xlu0 %v635, 126
        %v640 = vpop.permute.xlu0 %639
        %641 = vrot.lane.b32.xlu0 %v636, 126
        %v642 = vpop.permute.xlu0 %641
        %v645 = vadd.f32 %v631, %v640
        %v646 = vadd.f32 %v632, %v642
        %s647 = sld [smem:[#allocation3 + $0x1f]]
        %v648 = vstv %s647
        %v649 = vmul.f32 %v648, %v612
        %v650 = vmul.f32 %v648, %v613
        %653 = vrot.lane.b32.xlu0 %v649, 125
        %v654 = vpop.permute.xlu0 %653
        %655 = vrot.lane.b32.xlu0 %v650, 125
        %v656 = vpop.permute.xlu0 %655
        %v659 = vadd.f32 %v645, %v654
        %v660 = vadd.f32 %v646, %v656
        %s661 = sld [smem:[#allocation3 + $0x20]]
        %v662 = vstv %s661
        %v663 = vmul.f32 %v662, %v612
        %v664 = vmul.f32 %v662, %v613
        %667 = vrot.lane.b32.xlu0 %v663, 124
        %v668 = vpop.permute.xlu0 %667
        %669 = vrot.lane.b32.xlu0 %v664, 124
        %v670 = vpop.permute.xlu0 %669
        %v673 = vadd.f32 %v659, %v668
        %v674 = vadd.f32 %v660, %v670
        %s675 = sld [smem:[#allocation3 + $0x21]]
        %v676 = vstv %s675
        %v677 = vmul.f32 %v676, %v612
        %v678 = vmul.f32 %v676, %v613
        %681 = vrot.lane.b32.xlu0 %v677, 123
        %v682 = vpop.permute.xlu0 %681
        %683 = vrot.lane.b32.xlu0 %v678, 123
        %v684 = vpop.permute.xlu0 %683
        %v687 = vadd.f32 %v673, %v682
        %v688 = vadd.f32 %v674, %v684
        %s689 = sld [smem:[#allocation3 + $0x22]]
        %v690 = vstv %s689
        %v691 = vmul.f32 %v690, %v612
        %v692 = vmul.f32 %v690, %v613
        %695 = vrot.lane.b32.xlu0 %v691, 122
        %v696 = vpop.permute.xlu0 %695
        %697 = vrot.lane.b32.xlu0 %v692, 122
        %v698 = vpop.permute.xlu0 %697
        %v701 = vadd.f32 %v687, %v696
        %v702 = vadd.f32 %v688, %v698
        %s703 = sld [smem:[#allocation3 + $0x23]]
        %v704 = vld [vmem:[#allocation2 + $0x5] sm:$0xff]
        %v705 = vld [vmem:[#allocation2 + $0xd] sm:$0xff]
        %v706 = vstv %s703
        %v707 = vmul.f32 %v706, %v704
        %v708 = vmul.f32 %v706, %v705
        %v709 = vadd.f32 %v701, %v707
        %v710 = vadd.f32 %v702, %v708
        %s711 = sld [smem:[#allocation3 + $0x24]]
        %v712 = vstv %s711
        %v713 = vmul.f32 %v712, %v704
        %v714 = vmul.f32 %v712, %v705
        %717 = vrot.lane.b32.xlu0 %v713, 127
        %v718 = vpop.permute.xlu0 %717
        %719 = vrot.lane.b32.xlu0 %v714, 127
        %v720 = vpop.permute.xlu0 %719
        %v723 = vadd.f32 %v709, %v718
        %v724 = vadd.f32 %v710, %v720
        %s725 = sld [smem:[#allocation3 + $0x25]]
        %v726 = vstv %s725
        %v727 = vmul.f32 %v726, %v704
        %v728 = vmul.f32 %v726, %v705
        %731 = vrot.lane.b32.xlu0 %v727, 126
        %v732 = vpop.permute.xlu0 %731
        %733 = vrot.lane.b32.xlu0 %v728, 126
        %v734 = vpop.permute.xlu0 %733
        %v737 = vadd.f32 %v723, %v732
        %v738 = vadd.f32 %v724, %v734
        %s739 = sld [smem:[#allocation3 + $0x26]]
        %v740 = vstv %s739
        %v741 = vmul.f32 %v740, %v704
        %v742 = vmul.f32 %v740, %v705
        %745 = vrot.lane.b32.xlu0 %v741, 125
        %v746 = vpop.permute.xlu0 %745
        %747 = vrot.lane.b32.xlu0 %v742, 125
        %v748 = vpop.permute.xlu0 %747
        %v751 = vadd.f32 %v737, %v746
        %v752 = vadd.f32 %v738, %v748
        %s753 = sld [smem:[#allocation3 + $0x27]]
        %v754 = vstv %s753
        %v755 = vmul.f32 %v754, %v704
        %v756 = vmul.f32 %v754, %v705
        %759 = vrot.lane.b32.xlu0 %v755, 124
        %v760 = vpop.permute.xlu0 %759
        %761 = vrot.lane.b32.xlu0 %v756, 124
        %v762 = vpop.permute.xlu0 %761
        %v765 = vadd.f32 %v751, %v760
        %v766 = vadd.f32 %v752, %v762
        %s767 = sld [smem:[#allocation3 + $0x28]]
        %v768 = vstv %s767
        %v769 = vmul.f32 %v768, %v704
        %v770 = vmul.f32 %v768, %v705
        %773 = vrot.lane.b32.xlu0 %v769, 123
        %v774 = vpop.permute.xlu0 %773
        %775 = vrot.lane.b32.xlu0 %v770, 123
        %v776 = vpop.permute.xlu0 %775
        %v779 = vadd.f32 %v765, %v774
        %v780 = vadd.f32 %v766, %v776
        %s781 = sld [smem:[#allocation3 + $0x29]]
        %v782 = vstv %s781
        %v783 = vmul.f32 %v782, %v704
        %v784 = vmul.f32 %v782, %v705
        %787 = vrot.lane.b32.xlu0 %v783, 122
        %v788 = vpop.permute.xlu0 %787
        %789 = vrot.lane.b32.xlu0 %v784, 122
        %v790 = vpop.permute.xlu0 %789
        %v793 = vadd.f32 %v779, %v788
        %v794 = vadd.f32 %v780, %v790
        %s795 = sld [smem:[#allocation3 + $0x2a]]
        %v796 = vld [vmem:[#allocation2 + $0x6] sm:$0xff]
        %v797 = vld [vmem:[#allocation2 + $0xe] sm:$0xff]
        %v798 = vstv %s795
        %v799 = vmul.f32 %v798, %v796
        %v800 = vmul.f32 %v798, %v797
        %v801 = vadd.f32 %v793, %v799
        %v802 = vadd.f32 %v794, %v800
        %s803 = sld [smem:[#allocation3 + $0x2b]]
        %v804 = vstv %s803
        %v805 = vmul.f32 %v804, %v796
        %v806 = vmul.f32 %v804, %v797
        %809 = vrot.lane.b32.xlu0 %v805, 127
        %v810 = vpop.permute.xlu0 %809
        %811 = vrot.lane.b32.xlu0 %v806, 127
        %v812 = vpop.permute.xlu0 %811
        %v815 = vadd.f32 %v801, %v810
        %v816 = vadd.f32 %v802, %v812
        %s817 = sld [smem:[#allocation3 + $0x2c]]
        %v818 = vstv %s817
        %v819 = vmul.f32 %v818, %v796
        %v820 = vmul.f32 %v818, %v797
        %823 = vrot.lane.b32.xlu0 %v819, 126
        %v824 = vpop.permute.xlu0 %823
        %825 = vrot.lane.b32.xlu0 %v820, 126
        %v826 = vpop.permute.xlu0 %825
        %v829 = vadd.f32 %v815, %v824
        %v830 = vadd.f32 %v816, %v826
        %s831 = sld [smem:[#allocation3 + $0x2d]]
        %v832 = vstv %s831
        %v833 = vmul.f32 %v832, %v796
        %v834 = vmul.f32 %v832, %v797
        %837 = vrot.lane.b32.xlu0 %v833, 125
        %v838 = vpop.permute.xlu0 %837
        %839 = vrot.lane.b32.xlu0 %v834, 125
        %v840 = vpop.permute.xlu0 %839
        %v843 = vadd.f32 %v829, %v838
        %v844 = vadd.f32 %v830, %v840
        %s845 = sld [smem:[#allocation3 + $0x2e]]
        %v846 = vstv %s845
        %v847 = vmul.f32 %v846, %v796
        %v848 = vmul.f32 %v846, %v797
        %851 = vrot.lane.b32.xlu0 %v847, 124
        %v852 = vpop.permute.xlu0 %851
        %853 = vrot.lane.b32.xlu0 %v848, 124
        %v854 = vpop.permute.xlu0 %853
        %v857 = vadd.f32 %v843, %v852
        %v858 = vadd.f32 %v844, %v854
        %s859 = sld [smem:[#allocation3 + $0x2f]]
        %v860 = vstv %s859
        %v861 = vmul.f32 %v860, %v796
        %v862 = vmul.f32 %v860, %v797
        %865 = vrot.lane.b32.xlu0 %v861, 123
        %v866 = vpop.permute.xlu0 %865
        %867 = vrot.lane.b32.xlu0 %v862, 123
        %v868 = vpop.permute.xlu0 %867
        %v871 = vadd.f32 %v857, %v866
        %v872 = vadd.f32 %v858, %v868
        %s873 = sld [smem:[#allocation3 + $0x30]]
        %v874 = vstv %s873
        %v875 = vmul.f32 %v874, %v796
        %v876 = vmul.f32 %v874, %v797
        %879 = vrot.lane.b32.xlu0 %v875, 122
        %v880 = vpop.permute.xlu0 %879
        %881 = vrot.lane.b32.xlu0 %v876, 122
        %v882 = vpop.permute.xlu0 %881
        %v885 = vadd.f32 %v871, %v880
        %v886 = vadd.f32 %v872, %v882
        %s887 = sld [smem:[#allocation3 + $0x31]]
        %v888 = vld [vmem:[%s240] sm:$0xff]
        %v889 = vld [vmem:[%s240 + $0x8] sm:$0xff]
        %v890 = vstv %s887
        %v891 = vmul.f32 %v890, %v888
        %v892 = vmul.f32 %v890, %v889
        %v893 = vadd.f32 %v885, %v891
        %v894 = vadd.f32 %v886, %v892
        %s895 = sld [smem:[#allocation3 + $0x32]]
        %v896 = vstv %s895
        %v897 = vmul.f32 %v896, %v888
        %v898 = vmul.f32 %v896, %v889
        %901 = vrot.lane.b32.xlu0 %v897, 127
        %v902 = vpop.permute.xlu0 %901
        %903 = vrot.lane.b32.xlu0 %v898, 127
        %v904 = vpop.permute.xlu0 %903
        %v907 = vadd.f32 %v893, %v902
        %v908 = vadd.f32 %v894, %v904
        %s909 = sld [smem:[#allocation3 + $0x33]]
        %v910 = vstv %s909
        %v911 = vmul.f32 %v910, %v888
        %v912 = vmul.f32 %v910, %v889
        %915 = vrot.lane.b32.xlu0 %v911, 126
        %v916 = vpop.permute.xlu0 %915
        %917 = vrot.lane.b32.xlu0 %v912, 126
        %v918 = vpop.permute.xlu0 %917
        %v921 = vadd.f32 %v907, %v916
        %v922 = vadd.f32 %v908, %v918
        %s923 = sld [smem:[#allocation3 + $0x34]]
        %v924 = vstv %s923
        %v925 = vmul.f32 %v924, %v888
        %v926 = vmul.f32 %v924, %v889
        %929 = vrot.lane.b32.xlu0 %v925, 125
        %v930 = vpop.permute.xlu0 %929
        %931 = vrot.lane.b32.xlu0 %v926, 125
        %v932 = vpop.permute.xlu0 %931
        %v935 = vadd.f32 %v921, %v930
        %v936 = vadd.f32 %v922, %v932
        %s937 = sld [smem:[#allocation3 + $0x35]]
        %v938 = vstv %s937
        %v939 = vmul.f32 %v938, %v888
        %v940 = vmul.f32 %v938, %v889
        %943 = vrot.lane.b32.xlu0 %v939, 124
        %v944 = vpop.permute.xlu0 %943
        %945 = vrot.lane.b32.xlu0 %v940, 124
        %v946 = vpop.permute.xlu0 %945
        %v949 = vadd.f32 %v935, %v944
        %v950 = vadd.f32 %v936, %v946
        %s951 = sld [smem:[#allocation3 + $0x36]]
        %v952 = vstv %s951
        %v953 = vmul.f32 %v952, %v888
        %v954 = vmul.f32 %v952, %v889
        %957 = vrot.lane.b32.xlu0 %v953, 123
        %v958 = vpop.permute.xlu0 %957
        %959 = vrot.lane.b32.xlu0 %v954, 123
        %v960 = vpop.permute.xlu0 %959
        %v963 = vadd.f32 %v949, %v958
        %v964 = vadd.f32 %v950, %v960
        %s965 = sld [smem:[#allocation3 + $0x37]]
        %v966 = vstv %s965
        %v967 = vmul.f32 %v966, %v888
        %v968 = vmul.f32 %v966, %v889
        %971 = vrot.lane.b32.xlu0 %v967, 122
        %v972 = vpop.permute.xlu0 %971
        %973 = vrot.lane.b32.xlu0 %v968, 122
        %v974 = vpop.permute.xlu0 %973
        %v977 = vadd.f32 %v963, %v972
        %v978 = vadd.f32 %v964, %v974
        %s979 = sld [smem:[#allocation3 + $0x38]]
        %v980 = vld [vmem:[%s240 + $0x1] sm:$0xff]
        %v981 = vld [vmem:[%s240 + $0x9] sm:$0xff]
        %v982 = vstv %s979
        %v983 = vmul.f32 %v982, %v980
        %v984 = vmul.f32 %v982, %v981
        %v985 = vadd.f32 %v977, %v983
        %v986 = vadd.f32 %v978, %v984
        %s987 = sld [smem:[#allocation3 + $0x39]]
        %v988 = vstv %s987
        %v989 = vmul.f32 %v988, %v980
        %v990 = vmul.f32 %v988, %v981
        %993 = vrot.lane.b32.xlu0 %v989, 127
        %v994 = vpop.permute.xlu0 %993
        %995 = vrot.lane.b32.xlu0 %v990, 127
        %v996 = vpop.permute.xlu0 %995
        %v999 = vadd.f32 %v985, %v994
        %v1000 = vadd.f32 %v986, %v996
        %s1001 = sld [smem:[#allocation3 + $0x3a]]
        %v1002 = vstv %s1001
        %v1003 = vmul.f32 %v1002, %v980
        %v1004 = vmul.f32 %v1002, %v981
        %1007 = vrot.lane.b32.xlu0 %v1003, 126
        %v1008 = vpop.permute.xlu0 %1007
        %1009 = vrot.lane.b32.xlu0 %v1004, 126
        %v1010 = vpop.permute.xlu0 %1009
        %v1013 = vadd.f32 %v999, %v1008
        %v1014 = vadd.f32 %v1000, %v1010
        %s1015 = sld [smem:[#allocation3 + $0x3b]]
        %v1016 = vstv %s1015
        %v1017 = vmul.f32 %v1016, %v980
        %v1018 = vmul.f32 %v1016, %v981
        %1021 = vrot.lane.b32.xlu0 %v1017, 125
        %v1022 = vpop.permute.xlu0 %1021
        %1023 = vrot.lane.b32.xlu0 %v1018, 125
        %v1024 = vpop.permute.xlu0 %1023
        %v1027 = vadd.f32 %v1013, %v1022
        %v1028 = vadd.f32 %v1014, %v1024
        %s1029 = sld [smem:[#allocation3 + $0x3c]]
        %v1030 = vstv %s1029
        %v1031 = vmul.f32 %v1030, %v980
        %v1032 = vmul.f32 %v1030, %v981
        %1035 = vrot.lane.b32.xlu0 %v1031, 124
        %v1036 = vpop.permute.xlu0 %1035
        %1037 = vrot.lane.b32.xlu0 %v1032, 124
        %v1038 = vpop.permute.xlu0 %1037
        %v1041 = vadd.f32 %v1027, %v1036
        %v1042 = vadd.f32 %v1028, %v1038
        %s1043 = sld [smem:[#allocation3 + $0x3d]]
        %v1044 = vstv %s1043
        %v1045 = vmul.f32 %v1044, %v980
        %v1046 = vmul.f32 %v1044, %v981
        %1049 = vrot.lane.b32.xlu0 %v1045, 123
        %v1050 = vpop.permute.xlu0 %1049
        %1051 = vrot.lane.b32.xlu0 %v1046, 123
        %v1052 = vpop.permute.xlu0 %1051
        %v1055 = vadd.f32 %v1041, %v1050
        %v1056 = vadd.f32 %v1042, %v1052
        %s1057 = sld [smem:[#allocation3 + $0x3e]]
        %v1058 = vstv %s1057
        %v1059 = vmul.f32 %v1058, %v980
        %v1060 = vmul.f32 %v1058, %v981
        %1063 = vrot.lane.b32.xlu0 %v1059, 122
        %v1064 = vpop.permute.xlu0 %1063
        %1065 = vrot.lane.b32.xlu0 %v1060, 122
        %v1066 = vpop.permute.xlu0 %1065
        %v1069 = vadd.f32 %v1055, %v1064
        %v1070 = vadd.f32 %v1056, %v1066
        %s1071 = sld [smem:[#allocation3 + $0x3f]]
        %v1072 = vld [vmem:[%s240 + $0x2] sm:$0xff]
        %v1073 = vld [vmem:[%s240 + $0xa] sm:$0xff]
        %v1074 = vstv %s1071
        %v1075 = vmul.f32 %v1074, %v1072
        %v1076 = vmul.f32 %v1074, %v1073
        %v1077 = vadd.f32 %v1069, %v1075
        %v1078 = vadd.f32 %v1070, %v1076
        %s1079 = sld [smem:[#allocation3 + $0x40]]
        %v1080 = vstv %s1079
        %v1081 = vmul.f32 %v1080, %v1072
        %v1082 = vmul.f32 %v1080, %v1073
        %1085 = vrot.lane.b32.xlu0 %v1081, 127
        %v1086 = vpop.permute.xlu0 %1085
        %1087 = vrot.lane.b32.xlu0 %v1082, 127
        %v1088 = vpop.permute.xlu0 %1087
        %v1091 = vadd.f32 %v1077, %v1086
        %v1092 = vadd.f32 %v1078, %v1088
        %s1093 = sld [smem:[#allocation3 + $0x41]]
        %v1094 = vstv %s1093
        %v1095 = vmul.f32 %v1094, %v1072
        %v1096 = vmul.f32 %v1094, %v1073
        %1099 = vrot.lane.b32.xlu0 %v1095, 126
        %v1100 = vpop.permute.xlu0 %1099
        %1101 = vrot.lane.b32.xlu0 %v1096, 126
        %v1102 = vpop.permute.xlu0 %1101
        %v1105 = vadd.f32 %v1091, %v1100
        %v1106 = vadd.f32 %v1092, %v1102
        %s1107 = sld [smem:[#allocation3 + $0x42]]
        %v1108 = vstv %s1107
        %v1109 = vmul.f32 %v1108, %v1072
        %v1110 = vmul.f32 %v1108, %v1073
        %1113 = vrot.lane.b32.xlu0 %v1109, 125
        %v1114 = vpop.permute.xlu0 %1113
        %1115 = vrot.lane.b32.xlu0 %v1110, 125
        %v1116 = vpop.permute.xlu0 %1115
        %v1119 = vadd.f32 %v1105, %v1114
        %v1120 = vadd.f32 %v1106, %v1116
        %s1121 = sld [smem:[#allocation3 + $0x43]]
        %v1122 = vstv %s1121
        %v1123 = vmul.f32 %v1122, %v1072
        %v1124 = vmul.f32 %v1122, %v1073
        %1127 = vrot.lane.b32.xlu0 %v1123, 124
        %v1128 = vpop.permute.xlu0 %1127
        %1129 = vrot.lane.b32.xlu0 %v1124, 124
        %v1130 = vpop.permute.xlu0 %1129
        %v1133 = vadd.f32 %v1119, %v1128
        %v1134 = vadd.f32 %v1120, %v1130
        %s1135 = sld [smem:[#allocation3 + $0x44]]
        %v1136 = vstv %s1135
        %v1137 = vmul.f32 %v1136, %v1072
        %v1138 = vmul.f32 %v1136, %v1073
        %1141 = vrot.lane.b32.xlu0 %v1137, 123
        %v1142 = vpop.permute.xlu0 %1141
        %1143 = vrot.lane.b32.xlu0 %v1138, 123
        %v1144 = vpop.permute.xlu0 %1143
        %v1147 = vadd.f32 %v1133, %v1142
        %v1148 = vadd.f32 %v1134, %v1144
        %s1149 = sld [smem:[#allocation3 + $0x45]]
        %v1150 = vstv %s1149
        %v1151 = vmul.f32 %v1150, %v1072
        %v1152 = vmul.f32 %v1150, %v1073
        %1155 = vrot.lane.b32.xlu0 %v1151, 122
        %v1156 = vpop.permute.xlu0 %1155
        %1157 = vrot.lane.b32.xlu0 %v1152, 122
        %v1158 = vpop.permute.xlu0 %1157
        %v1161 = vadd.f32 %v1147, %v1156
        %v1162 = vadd.f32 %v1148, %v1158
        %s1163 = sld [smem:[#allocation3 + $0x46]]
        %v1164 = vld [vmem:[%s240 + $0x3] sm:$0xff]
        %v1165 = vld [vmem:[%s240 + $0xb] sm:$0xff]
        %v1166 = vstv %s1163
        %v1167 = vmul.f32 %v1166, %v1164
        %v1168 = vmul.f32 %v1166, %v1165
        %v1169 = vadd.f32 %v1161, %v1167
        %v1170 = vadd.f32 %v1162, %v1168
        %s1171 = sld [smem:[#allocation3 + $0x47]]
        %v1172 = vstv %s1171
        %v1173 = vmul.f32 %v1172, %v1164
        %v1174 = vmul.f32 %v1172, %v1165
        %1177 = vrot.lane.b32.xlu0 %v1173, 127
        %v1178 = vpop.permute.xlu0 %1177
        %1179 = vrot.lane.b32.xlu0 %v1174, 127
        %v1180 = vpop.permute.xlu0 %1179
        %v1183 = vadd.f32 %v1169, %v1178
        %v1184 = vadd.f32 %v1170, %v1180
        %s1185 = sld [smem:[#allocation3 + $0x48]]
        %v1186 = vstv %s1185
        %v1187 = vmul.f32 %v1186, %v1164
        %v1188 = vmul.f32 %v1186, %v1165
        %1191 = vrot.lane.b32.xlu0 %v1187, 126
        %v1192 = vpop.permute.xlu0 %1191
        %1193 = vrot.lane.b32.xlu0 %v1188, 126
        %v1194 = vpop.permute.xlu0 %1193
        %v1197 = vadd.f32 %v1183, %v1192
        %v1198 = vadd.f32 %v1184, %v1194
        %s1199 = sld [smem:[#allocation3 + $0x49]]
        %v1200 = vstv %s1199
        %v1201 = vmul.f32 %v1200, %v1164
        %v1202 = vmul.f32 %v1200, %v1165
        %1205 = vrot.lane.b32.xlu0 %v1201, 125
        %v1206 = vpop.permute.xlu0 %1205
        %1207 = vrot.lane.b32.xlu0 %v1202, 125
        %v1208 = vpop.permute.xlu0 %1207
        %v1211 = vadd.f32 %v1197, %v1206
        %v1212 = vadd.f32 %v1198, %v1208
        %s1213 = sld [smem:[#allocation3 + $0x4a]]
        %v1214 = vstv %s1213
        %v1215 = vmul.f32 %v1214, %v1164
        %v1216 = vmul.f32 %v1214, %v1165
        %1219 = vrot.lane.b32.xlu0 %v1215, 124
        %v1220 = vpop.permute.xlu0 %1219
        %1221 = vrot.lane.b32.xlu0 %v1216, 124
        %v1222 = vpop.permute.xlu0 %1221
        %v1225 = vadd.f32 %v1211, %v1220
        %v1226 = vadd.f32 %v1212, %v1222
        %s1227 = sld [smem:[#allocation3 + $0x4b]]
        %v1228 = vstv %s1227
        %v1229 = vmul.f32 %v1228, %v1164
        %v1230 = vmul.f32 %v1228, %v1165
        %1233 = vrot.lane.b32.xlu0 %v1229, 123
        %v1234 = vpop.permute.xlu0 %1233
        %1235 = vrot.lane.b32.xlu0 %v1230, 123
        %v1236 = vpop.permute.xlu0 %1235
        %v1239 = vadd.f32 %v1225, %v1234
        %v1240 = vadd.f32 %v1226, %v1236
        %s1241 = sld [smem:[#allocation3 + $0x4c]]
        %v1242 = vstv %s1241
        %v1243 = vmul.f32 %v1242, %v1164
        %v1244 = vmul.f32 %v1242, %v1165
        %1247 = vrot.lane.b32.xlu0 %v1243, 122
        %v1248 = vpop.permute.xlu0 %1247
        %1249 = vrot.lane.b32.xlu0 %v1244, 122
        %v1250 = vpop.permute.xlu0 %1249
        %v1253 = vadd.f32 %v1239, %v1248
        %v1254 = vadd.f32 %v1240, %v1250
        %s1255 = sld [smem:[#allocation3 + $0x4d]]
        %v1256 = vld [vmem:[%s240 + $0x4] sm:$0xff]
        %v1257 = vld [vmem:[%s240 + $0xc] sm:$0xff]
        %v1258 = vstv %s1255
        %v1259 = vmul.f32 %v1258, %v1256
        %v1260 = vmul.f32 %v1258, %v1257
        %v1261 = vadd.f32 %v1253, %v1259
        %v1262 = vadd.f32 %v1254, %v1260
        %s1263 = sld [smem:[#allocation3 + $0x4e]]
        %v1264 = vstv %s1263
        %v1265 = vmul.f32 %v1264, %v1256
        %v1266 = vmul.f32 %v1264, %v1257
        %1269 = vrot.lane.b32.xlu0 %v1265, 127
        %v1270 = vpop.permute.xlu0 %1269
        %1271 = vrot.lane.b32.xlu0 %v1266, 127
        %v1272 = vpop.permute.xlu0 %1271
        %v1275 = vadd.f32 %v1261, %v1270
        %v1276 = vadd.f32 %v1262, %v1272
        %s1277 = sld [smem:[#allocation3 + $0x4f]]
        %v1278 = vstv %s1277
        %v1279 = vmul.f32 %v1278, %v1256
        %v1280 = vmul.f32 %v1278, %v1257
        %1283 = vrot.lane.b32.xlu0 %v1279, 126
        %v1284 = vpop.permute.xlu0 %1283
        %1285 = vrot.lane.b32.xlu0 %v1280, 126
        %v1286 = vpop.permute.xlu0 %1285
        %v1289 = vadd.f32 %v1275, %v1284
        %v1290 = vadd.f32 %v1276, %v1286
        %s1291 = sld [smem:[#allocation3 + $0x50]]
        %v1292 = vstv %s1291
        %v1293 = vmul.f32 %v1292, %v1256
        %v1294 = vmul.f32 %v1292, %v1257
        %1297 = vrot.lane.b32.xlu0 %v1293, 125
        %v1298 = vpop.permute.xlu0 %1297
        %1299 = vrot.lane.b32.xlu0 %v1294, 125
        %v1300 = vpop.permute.xlu0 %1299
        %v1303 = vadd.f32 %v1289, %v1298
        %v1304 = vadd.f32 %v1290, %v1300
        %s1305 = sld [smem:[#allocation3 + $0x51]]
        %v1306 = vstv %s1305
        %v1307 = vmul.f32 %v1306, %v1256
        %v1308 = vmul.f32 %v1306, %v1257
        %1311 = vrot.lane.b32.xlu0 %v1307, 124
        %v1312 = vpop.permute.xlu0 %1311
        %1313 = vrot.lane.b32.xlu0 %v1308, 124
        %v1314 = vpop.permute.xlu0 %1313
        %v1317 = vadd.f32 %v1303, %v1312
        %v1318 = vadd.f32 %v1304, %v1314
        %s1319 = sld [smem:[#allocation3 + $0x52]]
        %v1320 = vstv %s1319
        %v1321 = vmul.f32 %v1320, %v1256
        %v1322 = vmul.f32 %v1320, %v1257
        %1325 = vrot.lane.b32.xlu0 %v1321, 123
        %v1326 = vpop.permute.xlu0 %1325
        %1327 = vrot.lane.b32.xlu0 %v1322, 123
        %v1328 = vpop.permute.xlu0 %1327
        %v1331 = vadd.f32 %v1317, %v1326
        %v1332 = vadd.f32 %v1318, %v1328
        %s1333 = sld [smem:[#allocation3 + $0x53]]
        %v1334 = vstv %s1333
        %v1335 = vmul.f32 %v1334, %v1256
        %v1336 = vmul.f32 %v1334, %v1257
        %1339 = vrot.lane.b32.xlu0 %v1335, 122
        %v1340 = vpop.permute.xlu0 %1339
        %1341 = vrot.lane.b32.xlu0 %v1336, 122
        %v1342 = vpop.permute.xlu0 %1341
        %v1345 = vadd.f32 %v1331, %v1340
        %v1346 = vadd.f32 %v1332, %v1342
        %s1347 = sld [smem:[#allocation3 + $0x54]]
        %v1348 = vld [vmem:[%s240 + $0x5] sm:$0xff]
        %v1349 = vld [vmem:[%s240 + $0xd] sm:$0xff]
        %v1350 = vstv %s1347
        %v1351 = vmul.f32 %v1350, %v1348
        %v1352 = vmul.f32 %v1350, %v1349
        %v1353 = vadd.f32 %v1345, %v1351
        %v1354 = vadd.f32 %v1346, %v1352
        %s1355 = sld [smem:[#allocation3 + $0x55]]
        %v1356 = vstv %s1355
        %v1357 = vmul.f32 %v1356, %v1348
        %v1358 = vmul.f32 %v1356, %v1349
        %1361 = vrot.lane.b32.xlu0 %v1357, 127
        %v1362 = vpop.permute.xlu0 %1361
        %1363 = vrot.lane.b32.xlu0 %v1358, 127
        %v1364 = vpop.permute.xlu0 %1363
        %v1367 = vadd.f32 %v1353, %v1362
        %v1368 = vadd.f32 %v1354, %v1364
        %s1369 = sld [smem:[#allocation3 + $0x56]]
        %v1370 = vstv %s1369
        %v1371 = vmul.f32 %v1370, %v1348
        %v1372 = vmul.f32 %v1370, %v1349
        %1375 = vrot.lane.b32.xlu0 %v1371, 126
        %v1376 = vpop.permute.xlu0 %1375
        %1377 = vrot.lane.b32.xlu0 %v1372, 126
        %v1378 = vpop.permute.xlu0 %1377
        %v1381 = vadd.f32 %v1367, %v1376
        %v1382 = vadd.f32 %v1368, %v1378
        %s1383 = sld [smem:[#allocation3 + $0x57]]
        %v1384 = vstv %s1383
        %v1385 = vmul.f32 %v1384, %v1348
        %v1386 = vmul.f32 %v1384, %v1349
        %1389 = vrot.lane.b32.xlu0 %v1385, 125
        %v1390 = vpop.permute.xlu0 %1389
        %1391 = vrot.lane.b32.xlu0 %v1386, 125
        %v1392 = vpop.permute.xlu0 %1391
        %v1395 = vadd.f32 %v1381, %v1390
        %v1396 = vadd.f32 %v1382, %v1392
        %s1397 = sld [smem:[#allocation3 + $0x58]]
        %v1398 = vstv %s1397
        %v1399 = vmul.f32 %v1398, %v1348
        %v1400 = vmul.f32 %v1398, %v1349
        %1403 = vrot.lane.b32.xlu0 %v1399, 124
        %v1404 = vpop.permute.xlu0 %1403
        %1405 = vrot.lane.b32.xlu0 %v1400, 124
        %v1406 = vpop.permute.xlu0 %1405
        %v1409 = vadd.f32 %v1395, %v1404
        %v1410 = vadd.f32 %v1396, %v1406
        %s1411 = sld [smem:[#allocation3 + $0x59]]
        %v1412 = vstv %s1411
        %v1413 = vmul.f32 %v1412, %v1348
        %v1414 = vmul.f32 %v1412, %v1349
        %1417 = vrot.lane.b32.xlu0 %v1413, 123
        %v1418 = vpop.permute.xlu0 %1417
        %1419 = vrot.lane.b32.xlu0 %v1414, 123
        %v1420 = vpop.permute.xlu0 %1419
        %v1423 = vadd.f32 %v1409, %v1418
        %v1424 = vadd.f32 %v1410, %v1420
        %s1425 = sld [smem:[#allocation3 + $0x5a]]
        %v1426 = vstv %s1425
        %v1427 = vmul.f32 %v1426, %v1348
        %v1428 = vmul.f32 %v1426, %v1349
        %1431 = vrot.lane.b32.xlu0 %v1427, 122
        %v1432 = vpop.permute.xlu0 %1431
        %1433 = vrot.lane.b32.xlu0 %v1428, 122
        %v1434 = vpop.permute.xlu0 %1433
        %v1437 = vadd.f32 %v1423, %v1432
        %v1438 = vadd.f32 %v1424, %v1434
        %s1439 = sld [smem:[#allocation3 + $0x5b]]
        %v1440 = vld [vmem:[%s240 + $0x6] sm:$0xff]
        %v1441 = vld [vmem:[%s240 + $0xe] sm:$0xff]
        %v1442 = vstv %s1439
        %v1443 = vmul.f32 %v1442, %v1440
        %v1444 = vmul.f32 %v1442, %v1441
        %v1445 = vadd.f32 %v1437, %v1443
        %v1446 = vadd.f32 %v1438, %v1444
        %s1447 = sld [smem:[#allocation3 + $0x5c]]
        %v1448 = vstv %s1447
        %v1449 = vmul.f32 %v1448, %v1440
        %v1450 = vmul.f32 %v1448, %v1441
        %1453 = vrot.lane.b32.xlu0 %v1449, 127
        %v1454 = vpop.permute.xlu0 %1453
        %1455 = vrot.lane.b32.xlu0 %v1450, 127
        %v1456 = vpop.permute.xlu0 %1455
        %v1459 = vadd.f32 %v1445, %v1454
        %v1460 = vadd.f32 %v1446, %v1456
        %s1461 = sld [smem:[#allocation3 + $0x5d]]
        %v1462 = vstv %s1461
        %v1463 = vmul.f32 %v1462, %v1440
        %v1464 = vmul.f32 %v1462, %v1441
        %1467 = vrot.lane.b32.xlu0 %v1463, 126
        %v1468 = vpop.permute.xlu0 %1467
        %1469 = vrot.lane.b32.xlu0 %v1464, 126
        %v1470 = vpop.permute.xlu0 %1469
        %v1473 = vadd.f32 %v1459, %v1468
        %v1474 = vadd.f32 %v1460, %v1470
        %s1475 = sld [smem:[#allocation3 + $0x5e]]
        %v1476 = vstv %s1475
        %v1477 = vmul.f32 %v1476, %v1440
        %v1478 = vmul.f32 %v1476, %v1441
        %1481 = vrot.lane.b32.xlu0 %v1477, 125
        %v1482 = vpop.permute.xlu0 %1481
        %1483 = vrot.lane.b32.xlu0 %v1478, 125
        %v1484 = vpop.permute.xlu0 %1483
        %v1487 = vadd.f32 %v1473, %v1482
        %v1488 = vadd.f32 %v1474, %v1484
        %s1489 = sld [smem:[#allocation3 + $0x5f]]
        %v1490 = vstv %s1489
        %v1491 = vmul.f32 %v1490, %v1440
        %v1492 = vmul.f32 %v1490, %v1441
        %1495 = vrot.lane.b32.xlu0 %v1491, 124
        %v1496 = vpop.permute.xlu0 %1495
        %1497 = vrot.lane.b32.xlu0 %v1492, 124
        %v1498 = vpop.permute.xlu0 %1497
        %v1501 = vadd.f32 %v1487, %v1496
        %v1502 = vadd.f32 %v1488, %v1498
        %s1503 = sld [smem:[#allocation3 + $0x60]]
        %v1504 = vstv %s1503
        %v1505 = vmul.f32 %v1504, %v1440
        %v1506 = vmul.f32 %v1504, %v1441
        %1509 = vrot.lane.b32.xlu0 %v1505, 123
        %v1510 = vpop.permute.xlu0 %1509
        %1511 = vrot.lane.b32.xlu0 %v1506, 123
        %v1512 = vpop.permute.xlu0 %1511
        %v1515 = vadd.f32 %v1501, %v1510
        %v1516 = vadd.f32 %v1502, %v1512
        %s1517 = sld [smem:[#allocation3 + $0x61]]
        %v1518 = vstv %s1517
        %v1519 = vmul.f32 %v1518, %v1440
        %v1520 = vmul.f32 %v1518, %v1441
        %1523 = vrot.lane.b32.xlu0 %v1519, 122
        %v1524 = vpop.permute.xlu0 %1523
        %1525 = vrot.lane.b32.xlu0 %v1520, 122
        %v1526 = vpop.permute.xlu0 %1525
        %v1529 = vadd.f32 %v1515, %v1524
        %v1530 = vadd.f32 %v1516, %v1526
        %v1531 = vsub.f32 0.0, %v1529
        %v1532 = vsub.f32 0.0, %v1530
        %v1533 = vmul.f32 %v1531, 1.442695
        %v1534 = vpow.pop %v1533
        %v1535 = vmul.f32 %v1532, 1.442695
        %v1536 = vpow.pop %v1535
        %v1537 = vadd.f32 %v1534, 1.0
        %v1538 = vadd.f32 %v1536, 1.0
        %v1539 = vrcp.pop %v1537
        %v1540 = vmul.f32 1.0, %v1539
        %v1541 = vrcp.pop %v1538
        %v1542 = vmul.f32 1.0, %v1541
        %1543 = vst.msk [vmem:[%s173] sm:$0xff] %vm190, %v1540
        %1544 = vst.msk [vmem:[%s173 + $0x8] sm:$0xff] %vm190, %v1542
        %s1545 = sand.u32 %s75, 1
        %s1546 = scalar_lea.sflag [#allocation5], %s1545
        %s1547 = sand.u32 %s75, 1
        %s1548 = smul.addr %s1547, 16
        %s1549 = scalar_lea.vmem [#allocation8], %s1548
        // Predicated region
        $region37: #{tpu_custom_call.1} parent=27 // pred_check
          %p1550 = pneg %p85
        $region38: #{tpu_custom_call.1} parent=27 // pred_check_branch
          %1552 = sbr.rel (%p1550) target = $region40
        $region39: #{tpu_custom_call.1} parent=27 // pred_region
          %s1554 = ssub.s32 256, 256
          %1555 = vsyncadd %s1546, %s1554
          %s1556 = smul.addr %s20, 2
          %s1557 = smul.addr %s1556, 128
          %s1558 = scalar_lea.hbm %s2, %s1557
          %s1559 = sshll.u32 %s1549, 4
          %s1560 = int_to_ptr.vmem [resolvable:$true] %s1559
          %1565 = dma.vmem_to_hbm [thread:$0]  %s1560, 256, %s1558, %s1546, 128, 128, 8
        $region40: #{tpu_custom_call.1} parent=27 // pred_fallthru
          _
      $region28: #{tpu_custom_call.1} parent=5 // pred_fallthru
        _
      %p1566 = scmp.le.s32.totalorder 2, %s15
      // Predicated region
      $region41: #{tpu_custom_call.1} parent=5 // pred_check
        %p1567 = pneg %p1566
      $region42: #{tpu_custom_call.1} parent=5 // pred_check_branch
        %1569 = sbr.rel (%p1567) target = $region44
      $region43: #{tpu_custom_call.1} parent=5 // pred_region
        %s1570 = ssub.s32 %s15, 2
        // Predicated region
        $region45: #{tpu_custom_call.1} parent=43 // pred_check
          %p1571 = pneg %p91
        $region46: #{tpu_custom_call.1} parent=43 // pred_check_branch
          %1573 = sbr.rel (%p1571) target = $region48
        $region47: #{tpu_custom_call.1} parent=43 // pred_region
          %s1574 = sand.u32 %s76, 1
          %s1575 = scalar_lea.sflag [#allocation5], %s1574
          %s1576 = sand.u32 %s76, 1
          %s1577 = smul.addr %s1576, 16
          %s1578 = scalar_lea.vmem [#allocation8], %s1577
          %1579 = dma.done %s1575, 256
        $region48: #{tpu_custom_call.1} parent=43 // pred_fallthru
          _
      $region44: #{tpu_custom_call.1} parent=5 // pred_fallthru
        _
    $region6: #{tpu_custom_call.1} parent=1 // loop_footer
      %s19 = sadd.s32 1, %s15
    $region7: #{tpu_custom_call.1} parent=1 // loop_footer_branch
      %14 = sbr.rel target = $region3
    $region8: #{tpu_custom_call.1} parent=1 // loop_exit
      _
    %1580 = vsyncpa [#allocation4], 1
    %s1581 = scalar_lea.sflag [#allocation4], 1
    %1582 = vsyncpa %s1581, 1
    %1583 = vsyncpa [#allocation5], 1
    %s1584 = scalar_lea.sflag [#allocation5], 1
    %1585 = vsyncpa %s1584, 1
    %1586 = vsyncpa [#allocation6], 1
    %s1587 = scalar_lea.sflag [#allocation6], 1
    %1588 = vsyncpa %s1587, 1

</llo_original>
